<compile_context>
chip_gen: v5e
topology: v5e:2x2
jax: 0.10.0
libtpu: 0.0.40
codegen_flags: <defaults>
</compile_context>

<pallas_src>
import functools
import math

import jax
import jax.numpy as jnp
from jax.experimental import pallas as pl
from jax.experimental.pallas import tpu as pltpu

# ---------------- synthetic task / decomposer configuration ----------------
BS = 256
N_AGENTS = 3
N_ENEMIES = 4
N_ENTITIES = N_AGENTS + N_ENEMIES
STATE_NF_AL = 6                        # per-ally state features
STATE_NF_EN = 5                        # per-enemy state features
N_ACTIONS_NO_ATTACK = 6
N_ACTIONS = N_ACTIONS_NO_ATTACK + N_ENEMIES
# state_last_action = True, has_attack_action = True (SMAC-style config)
ALLY_DIM = STATE_NF_AL + 2 * (N_ACTIONS_NO_ATTACK + 1)   # 20
ENEMY_DIM = STATE_NF_EN + 1                              # 6
FUSED_DIM = ALLY_DIM + ENEMY_DIM + 2                     # 28 (+2 bias-indicator rows)
ENTITY_EMBED_DIM = 32
ATTN_EMBED_DIM = 16
PER_ENTITY_OUT = ENTITY_EMBED_DIM + 2 * ATTN_EMBED_DIM   # 64 rows/entity: emb | q | k
STATE_DIM = N_AGENTS * STATE_NF_AL + N_ENEMIES * STATE_NF_EN + N_AGENTS * N_ACTIONS


def _round_up(x, m):
    return ((x + m - 1) // m) * m


def _pick_batch_tile(bs):
    """One big tile on single-TC chips (v5e/v6e); an even number of 128-lane
    'parallel' tiles on v7x so both TensorCores get work."""
    bs_128 = max(128, _round_up(bs, 128))
    try:
        kind = jax.devices()[0].device_kind.lower()
    except Exception:
        kind = ""
    if "v7" in kind and bs_128 > 128:
        return max(128, min(1024, _round_up(bs_128 // 2, 128)))
    return min(bs_128, 512)


# ------------------------------ Pallas kernel -------------------------------
def _state_encoder_kernel(w_ref, x_ref, out_ref, big_ref, *,
                          n_agents, n_entities, embed_dim, attn_dim):
    # w_ref  : (n_entities*64, n_entities*FUSED_DIM)  block-diag fused weight (W^T blocks)
    # x_ref  : (n_entities*FUSED_DIM, bt)             transposed fused features, batch on lanes
    # out_ref: (n_agents*E, bt)                       transposed agent embeddings (lane-dense)
    # big_ref: VMEM scratch (n_entities*64, bt)       per-entity [emb | q | k], batch on lanes
    pe = embed_dim + 2 * attn_dim                     # 64 output rows per entity

    # Single MXU dispatch: all entity encoders + scaled Q + K projections at once.
    big_ref[...] = jnp.dot(w_ref[...], x_ref[...],
                           preferred_element_type=jnp.float32)

    for j in range(n_agents):                         # static unroll (3 kept entities)
        k_j = big_ref[j * pe + embed_dim + attn_dim:(j + 1) * pe, :]       # (A, bt)

        # energies e[i][b] = <q_i[b], k_j[b]> : VPU multiply + sublane reduce, (1, bt)
        e = []
        for i in range(n_entities):                   # static unroll (7)
            q_i = big_ref[i * pe + embed_dim:i * pe + embed_dim + attn_dim, :]
            e.append(jnp.sum(q_i * k_j, axis=0, keepdims=True))

        # lane-dense softmax over the 7 source entities
        m = e[0]
        for t in e[1:]:
            m = jnp.maximum(m, t)
        p = [jnp.exp(t - m) for t in e]               # 7 single-vreg EUP pushes / agent
        denom = p[0]
        for t in p[1:]:
            denom = denom + t
        inv = pl.reciprocal(denom, approx=True)       # EUP seed + 2 Newton refinements
        inv = inv * (2.0 - denom * inv)
        inv = inv * (2.0 - denom * inv)

        # aggregation: acc = sum_i p_i * emb_i ; single normalization multiply at the end
        acc = p[0] * big_ref[0:embed_dim, :]
        for i in range(1, n_entities):
            acc = acc + p[i] * big_ref[i * pe:i * pe + embed_dim, :]
        out_ref[j * embed_dim:(j + 1) * embed_dim, :] = acc * inv


# ------------------------------ wrapper --------------------------------------
def state_encoder_pallas(ally_feats, enemy_feats, params, hidden_state, *,
                         batch_tile=None):
    """ally_feats: (bs, n_agents, ALLY_DIM), enemy_feats: (bs, n_enemies, ENEMY_DIM)."""
    bs = ally_feats.shape[0]
    bt = batch_tile if batch_tile is not None else _pick_batch_tile(bs)
    bt = max(128, _round_up(bt, 128))
    bs_pad = _round_up(bs, bt)
    f32 = jnp.float32

    # Transposed, entity-major fused feature slab (batch on lanes):
    #   row i*FUSED_DIM + f = feature f of entity i, column b = batch sample.
    ally_t = jnp.transpose(ally_feats.astype(f32), (1, 2, 0))    # (n_ag, ALLY_DIM, bs)
    enemy_t = jnp.transpose(enemy_feats.astype(f32), (1, 2, 0))  # (n_en, ENEMY_DIM, bs)
    ally_block = jnp.concatenate(
        [ally_t,
         jnp.zeros((N_AGENTS, ENEMY_DIM, bs), f32),
         jnp.ones((N_AGENTS, 1, bs), f32),                       # selects ba (+bq/bk)
         jnp.zeros((N_AGENTS, 1, bs), f32)], axis=1)
    enemy_block = jnp.concatenate(
        [jnp.zeros((N_ENEMIES, ALLY_DIM, bs), f32),
         enemy_t,
         jnp.zeros((N_ENEMIES, 1, bs), f32),
         jnp.ones((N_ENEMIES, 1, bs), f32)], axis=1)             # selects be (+bq/bk)
    x_t = jnp.concatenate([ally_block, enemy_block], axis=0)
    x_t = x_t.reshape(N_ENTITIES * FUSED_DIM, bs)                # free leading-dim merge
    if bs_pad != bs:
        x_t = jnp.pad(x_t, ((0, 0), (0, bs_pad - bs)))

    # Fused weight: entity encoders + Q/K projections with 1/sqrt(A) scale and all
    # biases folded in; replicated block-diagonally over entities.  Parameter-only,
    # so in a real model it can be precomputed/cached outside the step.
    hp = jax.lax.Precision.HIGHEST
    scale = 1.0 / math.sqrt(ATTN_EMBED_DIM)
    w_ent = jnp.concatenate(
        [params["wa"], params["we"], params["ba"], params["be"]], axis=0)   # (28, 32)
    bias_sel = jnp.zeros((FUSED_DIM, 1), f32).at[ALLY_DIM + ENEMY_DIM:, :].set(1.0)
    w_q = (jnp.dot(w_ent, params["wq"] * scale, precision=hp)
           + bias_sel * (params["bq"] * scale))                              # (28, 16)
    w_k = jnp.dot(w_ent, params["wk"], precision=hp) + bias_sel * params["bk"]
    w_fused = jnp.concatenate([w_ent, w_q, w_k], axis=1)                     # (28, 64)
    w_bd = jnp.kron(jnp.eye(N_ENTITIES, dtype=f32), w_fused.T)               # (448, 196)

    kernel = functools.partial(
        _state_encoder_kernel, n_agents=N_AGENTS, n_entities=N_ENTITIES,
        embed_dim=ENTITY_EMBED_DIM, attn_dim=ATTN_EMBED_DIM)

    out_t = pl.pallas_call(
        kernel,
        out_shape=jax.ShapeDtypeStruct((N_AGENTS * ENTITY_EMBED_DIM, bs_pad), f32),
        grid=(bs_pad // bt,),
        in_specs=[
            pl.BlockSpec((N_ENTITIES * PER_ENTITY_OUT, N_ENTITIES * FUSED_DIM),
                         lambda t: (0, 0)),
            pl.BlockSpec((N_ENTITIES * FUSED_DIM, bt), lambda t: (0, t)),
        ],
        out_specs=pl.BlockSpec((N_AGENTS * ENTITY_EMBED_DIM, bt), lambda t: (0, t)),
        scratch_shapes=[pltpu.VMEM((N_ENTITIES * PER_ENTITY_OUT, bt), f32)],
        compiler_params=pltpu.CompilerParams(dimension_semantics=("parallel",)),
    )(w_bd, x_t)

    out_t = out_t[:, :bs].reshape(N_AGENTS, ENTITY_EMBED_DIM, bs)
    attn_out = jnp.transpose(out_t, (2, 0, 1)).reshape(bs * N_AGENTS, ENTITY_EMBED_DIM)
    return attn_out, hidden_state


# ----------------------- plain-JAX glue (decomposer) ------------------------
# TODO(synk): task-decomposer bookkeeping (flat-state slicing, one-hot action
# decomposition) stays in plain JAX; it is shape plumbing, not kernel work.
def decompose_state(states):
    """Flat state = [ally feats | enemy feats | per-agent last-action one-hots]."""
    a_end = N_AGENTS * STATE_NF_AL
    e_end = a_end + N_ENEMIES * STATE_NF_EN
    bs = states.shape[0]
    ally = states[:, :a_end].reshape(bs, N_AGENTS, STATE_NF_AL)
    enemy = states[:, a_end:e_end].reshape(bs, N_ENEMIES, STATE_NF_EN)
    last_act = states[:, e_end:].reshape(bs, N_AGENTS, N_ACTIONS)
    return ally, enemy, last_act


def decompose_action_info(onehot):
    """Split action one-hot into attack part and compact (no-attack + any-attack) part."""
    attack = onehot[..., N_ACTIONS_NO_ATTACK:]
    compact = jnp.concatenate(
        [onehot[..., :N_ACTIONS_NO_ATTACK], attack.sum(-1, keepdims=True)], axis=-1)
    return attack, compact


def build_entity_features(states, actions):
    bs = states.shape[0]
    ally_states, enemy_states, last_action_states = decompose_state(states)

    cur_onehot = jax.nn.one_hot(actions.reshape(-1), N_ACTIONS, dtype=jnp.float32)
    cur_attack, cur_compact = decompose_action_info(cur_onehot)
    cur_compact = cur_compact.reshape(bs, N_AGENTS, N_ACTIONS_NO_ATTACK + 1)

    attacked = (cur_attack.reshape(bs, N_AGENTS, N_ENEMIES).sum(axis=1) > 0)
    attacked = attacked.astype(jnp.float32).reshape(bs, N_ENEMIES, 1)
    enemy_feats = jnp.concatenate([enemy_states, attacked], axis=-1)        # (bs, n_en, 6)

    _, last_compact = decompose_action_info(last_action_states)
    ally_feats = jnp.concatenate([ally_states, cur_compact, last_compact], axis=-1)
    return ally_feats.astype(jnp.float32), enemy_feats.astype(jnp.float32)


# ------------------------- deterministic parameters -------------------------
def init_params(key):
    def linear(key, fan_in, fan_out):
        kw, kb = jax.random.split(key)
        bound = 1.0 / math.sqrt(fan_in)
        w = jax.random.uniform(kw, (fan_in, fan_out), jnp.float32, -bound, bound)
        b = jax.random.uniform(kb, (1, fan_out), jnp.float32, -bound, bound)
        return w, b

    k1, k2, k3, k4 = jax.random.split(key, 4)
    wa, ba = linear(k1, ALLY_DIM, ENTITY_EMBED_DIM)
    we, be = linear(k2, ENEMY_DIM, ENTITY_EMBED_DIM)
    wq, bq = linear(k3, ENTITY_EMBED_DIM, ATTN_EMBED_DIM)
    wk, bk = linear(k4, ENTITY_EMBED_DIM, ATTN_EMBED_DIM)
    return dict(wa=wa, ba=ba, we=we, be=be, wq=wq, bq=bq, wk=wk, bk=bk)


# ------------------------------ pure-JAX reference ---------------------------
def state_encoder_ref(ally_feats, enemy_feats, params):
    hp = jax.lax.Precision.HIGHEST
    ally_embed = jnp.einsum("bif,fe->bie", ally_feats, params["wa"],
                            precision=hp) + params["ba"]
    enemy_embed = jnp.einsum("bif,fe->bie", enemy_feats, params["we"],
                             precision=hp) + params["be"]
    entity = jnp.concatenate([ally_embed, enemy_embed], axis=1)   # (bs, n_ent, E)
    q = jnp.einsum("bie,ea->bia", entity, params["wq"], precision=hp) + params["bq"]
    k = jnp.einsum("bie,ea->bia", entity, params["wk"], precision=hp) + params["bk"]
    energy = jnp.einsum("bia,bja->bij", q / math.sqrt(ATTN_EMBED_DIM), k, precision=hp)
    attn = jax.nn.softmax(energy, axis=1)                         # torch softmax(dim=1)
    out = jnp.einsum("bij,bie->bje", attn, entity, precision=hp)[:, :N_AGENTS, :]
    return out.reshape(-1, ENTITY_EMBED_DIM)


# ------------------------------------ main -----------------------------------
if __name__ == "__main__":
    key = jax.random.PRNGKey(0)
    k_state, k_act, k_param, k_hid = jax.random.split(key, 4)

    # build a flat state: random ally/enemy features + valid one-hot last actions
    feat_part = jax.random.normal(
        k_state, (BS, N_AGENTS * STATE_NF_AL + N_ENEMIES * STATE_NF_EN), jnp.float32)
    last_actions = jax.random.randint(k_act, (BS, N_AGENTS), 0, N_ACTIONS)
    last_onehot = jax.nn.one_hot(last_actions, N_ACTIONS, dtype=jnp.float32)
    states = jnp.concatenate([feat_part, last_onehot.reshape(BS, -1)], axis=-1)
    assert states.shape == (BS, STATE_DIM)

    actions = jax.random.randint(jax.random.fold_in(k_act, 1), (BS, N_AGENTS),
                                 0, N_ACTIONS)
    hidden_state = jax.random.normal(k_hid, (BS * N_AGENTS, 64), jnp.float32)
    params = init_params(k_param)

    ally_feats, enemy_feats = build_entity_features(states, actions)

    attn_out, hidden_out = state_encoder_pallas(ally_feats, enemy_feats, params,
                                                hidden_state)
    attn_out = jax.block_until_ready(attn_out)

    ref = state_encoder_ref(ally_feats, enemy_feats, params)
    assert attn_out.shape == (BS * N_AGENTS, ENTITY_EMBED_DIM)
    max_err = float(jnp.max(jnp.abs(attn_out - ref)))
    assert jnp.allclose(attn_out, ref, atol=1e-4, rtol=1e-4), \
        f"mismatch vs reference (max abs err {max_err})"
    assert jnp.array_equal(hidden_out, hidden_state)

    print("KERNEL_OK")
</pallas_src>

<mosaic_0001>
module attributes {stable_mosaic.version = 11 : i64} {
  func.func @_state_encoder_kernel(%arg0: i32, %arg1: memref<448x196xf32, #tpu.memory_space<vmem>>, %arg2: memref<196x256xf32, #tpu.memory_space<vmem>>, %arg3: memref<96x256xf32, #tpu.memory_space<vmem>>, %arg4: memref<448x256xf32, #tpu.memory_space<vmem>>) attributes {dimension_semantics = [#tpu.dimension_semantics<parallel>], iteration_bounds = array<i64: 1>, scalar_prefetch = 0 : i64, scratch_operands = 1 : i64, tpu.core_type = #tpu.core_type<tc>, window_params = [{pipeline_mode = #tpu.pipeline_mode<synchronous>, transform_indices = @transform_0, window_bounds = array<i64: 448, 196>}, {transform_indices = @transform_1, window_bounds = array<i64: 196, 256>}, {transform_indices = @transform_2, window_bounds = array<i64: 96, 256>}]} {
    %c0 = arith.constant 0 : index
    %c0_0 = arith.constant 0 : index
    %0 = vector.load %arg1[%c0, %c0_0] : memref<448x196xf32, #tpu.memory_space<vmem>>, vector<448x196xf32>
    %c0_1 = arith.constant 0 : index
    %c0_2 = arith.constant 0 : index
    %1 = vector.load %arg2[%c0_1, %c0_2] : memref<196x256xf32, #tpu.memory_space<vmem>>, vector<196x256xf32>
    %cst = arith.constant dense<0.000000e+00> : vector<448x256xf32>
    %2 = tpu.matmul %0, %1, %cst {dimension_numbers = #tpu.dot_dimension_numbers<[1], [0], [0], [1], [0, 0, 1, 1], [], []>} : vector<448x196xf32>, vector<196x256xf32>, vector<448x256xf32> -> vector<448x256xf32>
    %c0_3 = arith.constant 0 : index
    %c0_4 = arith.constant 0 : index
    %3 = vector.load %arg4[%c0_3, %c0_4] : memref<448x256xf32, #tpu.memory_space<vmem>>, vector<448x256xf32>
    tpu.vector_store %arg4[%c0_3, %c0_4], %2 {strides = array<i32>} : memref<448x256xf32, #tpu.memory_space<vmem>>, vector<448x256xf32>,
    %c48 = arith.constant 48 : index
    %c0_5 = arith.constant 0 : index
    %4 = vector.load %arg4[%c48, %c0_5] : memref<448x256xf32, #tpu.memory_space<vmem>>, vector<16x256xf32>
    %c32 = arith.constant 32 : index
    %c0_6 = arith.constant 0 : index
    %5 = vector.load %arg4[%c32, %c0_6] : memref<448x256xf32, #tpu.memory_space<vmem>>, vector<16x256xf32>
    %6 = arith.mulf %5, %4 : vector<16x256xf32>
    %cst_7 = arith.constant dense<0.000000e+00> : vector<256xf32>
    %7 = vector.multi_reduction <add>, %6, %cst_7 [0] : vector<16x256xf32> to vector<256xf32>
    %8 = vector.shape_cast %7 : vector<256xf32> to vector<1x256xf32>
    %c96 = arith.constant 96 : index
    %c0_8 = arith.constant 0 : index
    %9 = vector.load %arg4[%c96, %c0_8] : memref<448x256xf32, #tpu.memory_space<vmem>>, vector<16x256xf32>
    %10 = arith.mulf %9, %4 : vector<16x256xf32>
    %cst_9 = arith.constant dense<0.000000e+00> : vector<256xf32>
    %11 = vector.multi_reduction <add>, %10, %cst_9 [0] : vector<16x256xf32> to vector<256xf32>
    %12 = vector.shape_cast %11 : vector<256xf32> to vector<1x256xf32>
    %c160 = arith.constant 160 : index
    %c0_10 = arith.constant 0 : index
    %13 = vector.load %arg4[%c160, %c0_10] : memref<448x256xf32, #tpu.memory_space<vmem>>, vector<16x256xf32>
    %14 = arith.mulf %13, %4 : vector<16x256xf32>
    %cst_11 = arith.constant dense<0.000000e+00> : vector<256xf32>
    %15 = vector.multi_reduction <add>, %14, %cst_11 [0] : vector<16x256xf32> to vector<256xf32>
    %16 = vector.shape_cast %15 : vector<256xf32> to vector<1x256xf32>
    %c224 = arith.constant 224 : index
    %c0_12 = arith.constant 0 : index
    %17 = vector.load %arg4[%c224, %c0_12] : memref<448x256xf32, #tpu.memory_space<vmem>>, vector<16x256xf32>
    %18 = arith.mulf %17, %4 : vector<16x256xf32>
    %cst_13 = arith.constant dense<0.000000e+00> : vector<256xf32>
    %19 = vector.multi_reduction <add>, %18, %cst_13 [0] : vector<16x256xf32> to vector<256xf32>
    %20 = vector.shape_cast %19 : vector<256xf32> to vector<1x256xf32>
    %c288 = arith.constant 288 : index
    %c0_14 = arith.constant 0 : index
    %21 = vector.load %arg4[%c288, %c0_14] : memref<448x256xf32, #tpu.memory_space<vmem>>, vector<16x256xf32>
    %22 = arith.mulf %21, %4 : vector<16x256xf32>
    %cst_15 = arith.constant dense<0.000000e+00> : vector<256xf32>
    %23 = vector.multi_reduction <add>, %22, %cst_15 [0] : vector<16x256xf32> to vector<256xf32>
    %24 = vector.shape_cast %23 : vector<256xf32> to vector<1x256xf32>
    %c352 = arith.constant 352 : index
    %c0_16 = arith.constant 0 : index
    %25 = vector.load %arg4[%c352, %c0_16] : memref<448x256xf32, #tpu.memory_space<vmem>>, vector<16x256xf32>
    %26 = arith.mulf %25, %4 : vector<16x256xf32>
    %cst_17 = arith.constant dense<0.000000e+00> : vector<256xf32>
    %27 = vector.multi_reduction <add>, %26, %cst_17 [0] : vector<16x256xf32> to vector<256xf32>
    %28 = vector.shape_cast %27 : vector<256xf32> to vector<1x256xf32>
    %c416 = arith.constant 416 : index
    %c0_18 = arith.constant 0 : index
    %29 = vector.load %arg4[%c416, %c0_18] : memref<448x256xf32, #tpu.memory_space<vmem>>, vector<16x256xf32>
    %30 = arith.mulf %29, %4 : vector<16x256xf32>
    %cst_19 = arith.constant dense<0.000000e+00> : vector<256xf32>
    %31 = vector.multi_reduction <add>, %30, %cst_19 [0] : vector<16x256xf32> to vector<256xf32>
    %32 = vector.shape_cast %31 : vector<256xf32> to vector<1x256xf32>
    %33 = arith.maximumf %8, %12 : vector<1x256xf32>
    %34 = arith.maximumf %33, %16 : vector<1x256xf32>
    %35 = arith.maximumf %34, %20 : vector<1x256xf32>
    %36 = arith.maximumf %35, %24 : vector<1x256xf32>
    %37 = arith.maximumf %36, %28 : vector<1x256xf32>
    %38 = arith.maximumf %37, %32 : vector<1x256xf32>
    %39 = arith.subf %8, %38 : vector<1x256xf32>
    %40 = math.exp %39 : vector<1x256xf32>
    %41 = arith.subf %12, %38 : vector<1x256xf32>
    %42 = math.exp %41 : vector<1x256xf32>
    %43 = arith.subf %16, %38 : vector<1x256xf32>
    %44 = math.exp %43 : vector<1x256xf32>
    %45 = arith.subf %20, %38 : vector<1x256xf32>
    %46 = math.exp %45 : vector<1x256xf32>
    %47 = arith.subf %24, %38 : vector<1x256xf32>
    %48 = math.exp %47 : vector<1x256xf32>
    %49 = arith.subf %28, %38 : vector<1x256xf32>
    %50 = math.exp %49 : vector<1x256xf32>
    %51 = arith.subf %32, %38 : vector<1x256xf32>
    %52 = math.exp %51 : vector<1x256xf32>
    %53 = arith.addf %40, %42 : vector<1x256xf32>
    %54 = arith.addf %53, %44 : vector<1x256xf32>
    %55 = arith.addf %54, %46 : vector<1x256xf32>
    %56 = arith.addf %55, %48 : vector<1x256xf32>
    %57 = arith.addf %56, %50 : vector<1x256xf32>
    %58 = arith.addf %57, %52 : vector<1x256xf32>
    %59 = tpu.reciprocal %58 {approx = true} : vector<1x256xf32> -> vector<1x256xf32>
    %60 = arith.mulf %58, %59 : vector<1x256xf32>
    %cst_20 = arith.constant 2.000000e+00 : f32
    %61 = vector.broadcast %cst_20 : f32 to vector<1x256xf32>
    %62 = arith.subf %61, %60 : vector<1x256xf32>
    %63 = arith.mulf %59, %62 : vector<1x256xf32>
    %64 = arith.mulf %58, %63 : vector<1x256xf32>
    %cst_21 = arith.constant 2.000000e+00 : f32
    %65 = vector.broadcast %cst_21 : f32 to vector<1x256xf32>
    %66 = arith.subf %65, %64 : vector<1x256xf32>
    %67 = arith.mulf %63, %66 : vector<1x256xf32>
    %c0_22 = arith.constant 0 : index
    %c0_23 = arith.constant 0 : index
    %68 = vector.load %arg4[%c0_22, %c0_23] : memref<448x256xf32, #tpu.memory_space<vmem>>, vector<32x256xf32>
    %69 = vector.broadcast %40 : vector<1x256xf32> to vector<32x256xf32>
    %70 = arith.mulf %69, %68 : vector<32x256xf32>
    %c64 = arith.constant 64 : index
    %c0_24 = arith.constant 0 : index
    %71 = vector.load %arg4[%c64, %c0_24] : memref<448x256xf32, #tpu.memory_space<vmem>>, vector<32x256xf32>
    %72 = vector.broadcast %42 : vector<1x256xf32> to vector<32x256xf32>
    %73 = arith.mulf %72, %71 : vector<32x256xf32>
    %74 = arith.addf %70, %73 : vector<32x256xf32>
    %c128 = arith.constant 128 : index
    %c0_25 = arith.constant 0 : index
    %75 = vector.load %arg4[%c128, %c0_25] : memref<448x256xf32, #tpu.memory_space<vmem>>, vector<32x256xf32>
    %76 = vector.broadcast %44 : vector<1x256xf32> to vector<32x256xf32>
    %77 = arith.mulf %76, %75 : vector<32x256xf32>
    %78 = arith.addf %74, %77 : vector<32x256xf32>
    %c192 = arith.constant 192 : index
    %c0_26 = arith.constant 0 : index
    %79 = vector.load %arg4[%c192, %c0_26] : memref<448x256xf32, #tpu.memory_space<vmem>>, vector<32x256xf32>
    %80 = vector.broadcast %46 : vector<1x256xf32> to vector<32x256xf32>
    %81 = arith.mulf %80, %79 : vector<32x256xf32>
    %82 = arith.addf %78, %81 : vector<32x256xf32>
    %c256 = arith.constant 256 : index
    %c0_27 = arith.constant 0 : index
    %83 = vector.load %arg4[%c256, %c0_27] : memref<448x256xf32, #tpu.memory_space<vmem>>, vector<32x256xf32>
    %84 = vector.broadcast %48 : vector<1x256xf32> to vector<32x256xf32>
    %85 = arith.mulf %84, %83 : vector<32x256xf32>
    %86 = arith.addf %82, %85 : vector<32x256xf32>
    %c320 = arith.constant 320 : index
    %c0_28 = arith.constant 0 : index
    %87 = vector.load %arg4[%c320, %c0_28] : memref<448x256xf32, #tpu.memory_space<vmem>>, vector<32x256xf32>
    %88 = vector.broadcast %50 : vector<1x256xf32> to vector<32x256xf32>
    %89 = arith.mulf %88, %87 : vector<32x256xf32>
    %90 = arith.addf %86, %89 : vector<32x256xf32>
    %c384 = arith.constant 384 : index
    %c0_29 = arith.constant 0 : index
    %91 = vector.load %arg4[%c384, %c0_29] : memref<448x256xf32, #tpu.memory_space<vmem>>, vector<32x256xf32>
    %92 = vector.broadcast %52 : vector<1x256xf32> to vector<32x256xf32>
    %93 = arith.mulf %92, %91 : vector<32x256xf32>
    %94 = arith.addf %90, %93 : vector<32x256xf32>
    %95 = vector.broadcast %67 : vector<1x256xf32> to vector<32x256xf32>
    %96 = arith.mulf %94, %95 : vector<32x256xf32>
    %c0_30 = arith.constant 0 : index
    %c0_31 = arith.constant 0 : index
    %97 = vector.load %arg3[%c0_30, %c0_31] : memref<96x256xf32, #tpu.memory_space<vmem>>, vector<32x256xf32>
    tpu.vector_store %arg3[%c0_30, %c0_31], %96 {strides = array<i32>} : memref<96x256xf32, #tpu.memory_space<vmem>>, vector<32x256xf32>,
    %c112 = arith.constant 112 : index
    %c0_32 = arith.constant 0 : index
    %98 = vector.load %arg4[%c112, %c0_32] : memref<448x256xf32, #tpu.memory_space<vmem>>, vector<16x256xf32>
    %c32_33 = arith.constant 32 : index
    %c0_34 = arith.constant 0 : index
    %99 = vector.load %arg4[%c32_33, %c0_34] : memref<448x256xf32, #tpu.memory_space<vmem>>, vector<16x256xf32>
    %100 = arith.mulf %99, %98 : vector<16x256xf32>
    %cst_35 = arith.constant dense<0.000000e+00> : vector<256xf32>
    %101 = vector.multi_reduction <add>, %100, %cst_35 [0] : vector<16x256xf32> to vector<256xf32>
    %102 = vector.shape_cast %101 : vector<256xf32> to vector<1x256xf32>
    %c96_36 = arith.constant 96 : index
    %c0_37 = arith.constant 0 : index
    %103 = vector.load %arg4[%c96_36, %c0_37] : memref<448x256xf32, #tpu.memory_space<vmem>>, vector<16x256xf32>
    %104 = arith.mulf %103, %98 : vector<16x256xf32>
    %cst_38 = arith.constant dense<0.000000e+00> : vector<256xf32>
    %105 = vector.multi_reduction <add>, %104, %cst_38 [0] : vector<16x256xf32> to vector<256xf32>
    %106 = vector.shape_cast %105 : vector<256xf32> to vector<1x256xf32>
    %c160_39 = arith.constant 160 : index
    %c0_40 = arith.constant 0 : index
    %107 = vector.load %arg4[%c160_39, %c0_40] : memref<448x256xf32, #tpu.memory_space<vmem>>, vector<16x256xf32>
    %108 = arith.mulf %107, %98 : vector<16x256xf32>
    %cst_41 = arith.constant dense<0.000000e+00> : vector<256xf32>
    %109 = vector.multi_reduction <add>, %108, %cst_41 [0] : vector<16x256xf32> to vector<256xf32>
    %110 = vector.shape_cast %109 : vector<256xf32> to vector<1x256xf32>
    %c224_42 = arith.constant 224 : index
    %c0_43 = arith.constant 0 : index
    %111 = vector.load %arg4[%c224_42, %c0_43] : memref<448x256xf32, #tpu.memory_space<vmem>>, vector<16x256xf32>
    %112 = arith.mulf %111, %98 : vector<16x256xf32>
    %cst_44 = arith.constant dense<0.000000e+00> : vector<256xf32>
    %113 = vector.multi_reduction <add>, %112, %cst_44 [0] : vector<16x256xf32> to vector<256xf32>
    %114 = vector.shape_cast %113 : vector<256xf32> to vector<1x256xf32>
    %c288_45 = arith.constant 288 : index
    %c0_46 = arith.constant 0 : index
    %115 = vector.load %arg4[%c288_45, %c0_46] : memref<448x256xf32, #tpu.memory_space<vmem>>, vector<16x256xf32>
    %116 = arith.mulf %115, %98 : vector<16x256xf32>
    %cst_47 = arith.constant dense<0.000000e+00> : vector<256xf32>
    %117 = vector.multi_reduction <add>, %116, %cst_47 [0] : vector<16x256xf32> to vector<256xf32>
    %118 = vector.shape_cast %117 : vector<256xf32> to vector<1x256xf32>
    %c352_48 = arith.constant 352 : index
    %c0_49 = arith.constant 0 : index
    %119 = vector.load %arg4[%c352_48, %c0_49] : memref<448x256xf32, #tpu.memory_space<vmem>>, vector<16x256xf32>
    %120 = arith.mulf %119, %98 : vector<16x256xf32>
    %cst_50 = arith.constant dense<0.000000e+00> : vector<256xf32>
    %121 = vector.multi_reduction <add>, %120, %cst_50 [0] : vector<16x256xf32> to vector<256xf32>
    %122 = vector.shape_cast %121 : vector<256xf32> to vector<1x256xf32>
    %c416_51 = arith.constant 416 : index
    %c0_52 = arith.constant 0 : index
    %123 = vector.load %arg4[%c416_51, %c0_52] : memref<448x256xf32, #tpu.memory_space<vmem>>, vector<16x256xf32>
    %124 = arith.mulf %123, %98 : vector<16x256xf32>
    %cst_53 = arith.constant dense<0.000000e+00> : vector<256xf32>
    %125 = vector.multi_reduction <add>, %124, %cst_53 [0] : vector<16x256xf32> to vector<256xf32>
    %126 = vector.shape_cast %125 : vector<256xf32> to vector<1x256xf32>
    %127 = arith.maximumf %102, %106 : vector<1x256xf32>
    %128 = arith.maximumf %127, %110 : vector<1x256xf32>
    %129 = arith.maximumf %128, %114 : vector<1x256xf32>
    %130 = arith.maximumf %129, %118 : vector<1x256xf32>
    %131 = arith.maximumf %130, %122 : vector<1x256xf32>
    %132 = arith.maximumf %131, %126 : vector<1x256xf32>
    %133 = arith.subf %102, %132 : vector<1x256xf32>
    %134 = math.exp %133 : vector<1x256xf32>
    %135 = arith.subf %106, %132 : vector<1x256xf32>
    %136 = math.exp %135 : vector<1x256xf32>
    %137 = arith.subf %110, %132 : vector<1x256xf32>
    %138 = math.exp %137 : vector<1x256xf32>
    %139 = arith.subf %114, %132 : vector<1x256xf32>
    %140 = math.exp %139 : vector<1x256xf32>
    %141 = arith.subf %118, %132 : vector<1x256xf32>
    %142 = math.exp %141 : vector<1x256xf32>
    %143 = arith.subf %122, %132 : vector<1x256xf32>
    %144 = math.exp %143 : vector<1x256xf32>
    %145 = arith.subf %126, %132 : vector<1x256xf32>
    %146 = math.exp %145 : vector<1x256xf32>
    %147 = arith.addf %134, %136 : vector<1x256xf32>
    %148 = arith.addf %147, %138 : vector<1x256xf32>
    %149 = arith.addf %148, %140 : vector<1x256xf32>
    %150 = arith.addf %149, %142 : vector<1x256xf32>
    %151 = arith.addf %150, %144 : vector<1x256xf32>
    %152 = arith.addf %151, %146 : vector<1x256xf32>
    %153 = tpu.reciprocal %152 {approx = true} : vector<1x256xf32> -> vector<1x256xf32>
    %154 = arith.mulf %152, %153 : vector<1x256xf32>
    %cst_54 = arith.constant 2.000000e+00 : f32
    %155 = vector.broadcast %cst_54 : f32 to vector<1x256xf32>
    %156 = arith.subf %155, %154 : vector<1x256xf32>
    %157 = arith.mulf %153, %156 : vector<1x256xf32>
    %158 = arith.mulf %152, %157 : vector<1x256xf32>
    %cst_55 = arith.constant 2.000000e+00 : f32
    %159 = vector.broadcast %cst_55 : f32 to vector<1x256xf32>
    %160 = arith.subf %159, %158 : vector<1x256xf32>
    %161 = arith.mulf %157, %160 : vector<1x256xf32>
    %c0_56 = arith.constant 0 : index
    %c0_57 = arith.constant 0 : index
    %162 = vector.load %arg4[%c0_56, %c0_57] : memref<448x256xf32, #tpu.memory_space<vmem>>, vector<32x256xf32>
    %163 = vector.broadcast %134 : vector<1x256xf32> to vector<32x256xf32>
    %164 = arith.mulf %163, %162 : vector<32x256xf32>
    %c64_58 = arith.constant 64 : index
    %c0_59 = arith.constant 0 : index
    %165 = vector.load %arg4[%c64_58, %c0_59] : memref<448x256xf32, #tpu.memory_space<vmem>>, vector<32x256xf32>
    %166 = vector.broadcast %136 : vector<1x256xf32> to vector<32x256xf32>
    %167 = arith.mulf %166, %165 : vector<32x256xf32>
    %168 = arith.addf %164, %167 : vector<32x256xf32>
    %c128_60 = arith.constant 128 : index
    %c0_61 = arith.constant 0 : index
    %169 = vector.load %arg4[%c128_60, %c0_61] : memref<448x256xf32, #tpu.memory_space<vmem>>, vector<32x256xf32>
    %170 = vector.broadcast %138 : vector<1x256xf32> to vector<32x256xf32>
    %171 = arith.mulf %170, %169 : vector<32x256xf32>
    %172 = arith.addf %168, %171 : vector<32x256xf32>
    %c192_62 = arith.constant 192 : index
    %c0_63 = arith.constant 0 : index
    %173 = vector.load %arg4[%c192_62, %c0_63] : memref<448x256xf32, #tpu.memory_space<vmem>>, vector<32x256xf32>
    %174 = vector.broadcast %140 : vector<1x256xf32> to vector<32x256xf32>
    %175 = arith.mulf %174, %173 : vector<32x256xf32>
    %176 = arith.addf %172, %175 : vector<32x256xf32>
    %c256_64 = arith.constant 256 : index
    %c0_65 = arith.constant 0 : index
    %177 = vector.load %arg4[%c256_64, %c0_65] : memref<448x256xf32, #tpu.memory_space<vmem>>, vector<32x256xf32>
    %178 = vector.broadcast %142 : vector<1x256xf32> to vector<32x256xf32>
    %179 = arith.mulf %178, %177 : vector<32x256xf32>
    %180 = arith.addf %176, %179 : vector<32x256xf32>
    %c320_66 = arith.constant 320 : index
    %c0_67 = arith.constant 0 : index
    %181 = vector.load %arg4[%c320_66, %c0_67] : memref<448x256xf32, #tpu.memory_space<vmem>>, vector<32x256xf32>
    %182 = vector.broadcast %144 : vector<1x256xf32> to vector<32x256xf32>
    %183 = arith.mulf %182, %181 : vector<32x256xf32>
    %184 = arith.addf %180, %183 : vector<32x256xf32>
    %c384_68 = arith.constant 384 : index
    %c0_69 = arith.constant 0 : index
    %185 = vector.load %arg4[%c384_68, %c0_69] : memref<448x256xf32, #tpu.memory_space<vmem>>, vector<32x256xf32>
    %186 = vector.broadcast %146 : vector<1x256xf32> to vector<32x256xf32>
    %187 = arith.mulf %186, %185 : vector<32x256xf32>
    %188 = arith.addf %184, %187 : vector<32x256xf32>
    %189 = vector.broadcast %161 : vector<1x256xf32> to vector<32x256xf32>
    %190 = arith.mulf %188, %189 : vector<32x256xf32>
    %c32_70 = arith.constant 32 : index
    %c0_71 = arith.constant 0 : index
    %191 = vector.load %arg3[%c32_70, %c0_71] : memref<96x256xf32, #tpu.memory_space<vmem>>, vector<32x256xf32>
    tpu.vector_store %arg3[%c32_70, %c0_71], %190 {strides = array<i32>} : memref<96x256xf32, #tpu.memory_space<vmem>>, vector<32x256xf32>,
    %c176 = arith.constant 176 : index
    %c0_72 = arith.constant 0 : index
    %192 = vector.load %arg4[%c176, %c0_72] : memref<448x256xf32, #tpu.memory_space<vmem>>, vector<16x256xf32>
    %c32_73 = arith.constant 32 : index
    %c0_74 = arith.constant 0 : index
    %193 = vector.load %arg4[%c32_73, %c0_74] : memref<448x256xf32, #tpu.memory_space<vmem>>, vector<16x256xf32>
    %194 = arith.mulf %193, %192 : vector<16x256xf32>
    %cst_75 = arith.constant dense<0.000000e+00> : vector<256xf32>
    %195 = vector.multi_reduction <add>, %194, %cst_75 [0] : vector<16x256xf32> to vector<256xf32>
    %196 = vector.shape_cast %195 : vector<256xf32> to vector<1x256xf32>
    %c96_76 = arith.constant 96 : index
    %c0_77 = arith.constant 0 : index
    %197 = vector.load %arg4[%c96_76, %c0_77] : memref<448x256xf32, #tpu.memory_space<vmem>>, vector<16x256xf32>
    %198 = arith.mulf %197, %192 : vector<16x256xf32>
    %cst_78 = arith.constant dense<0.000000e+00> : vector<256xf32>
    %199 = vector.multi_reduction <add>, %198, %cst_78 [0] : vector<16x256xf32> to vector<256xf32>
    %200 = vector.shape_cast %199 : vector<256xf32> to vector<1x256xf32>
    %c160_79 = arith.constant 160 : index
    %c0_80 = arith.constant 0 : index
    %201 = vector.load %arg4[%c160_79, %c0_80] : memref<448x256xf32, #tpu.memory_space<vmem>>, vector<16x256xf32>
    %202 = arith.mulf %201, %192 : vector<16x256xf32>
    %cst_81 = arith.constant dense<0.000000e+00> : vector<256xf32>
    %203 = vector.multi_reduction <add>, %202, %cst_81 [0] : vector<16x256xf32> to vector<256xf32>
    %204 = vector.shape_cast %203 : vector<256xf32> to vector<1x256xf32>
    %c224_82 = arith.constant 224 : index
    %c0_83 = arith.constant 0 : index
    %205 = vector.load %arg4[%c224_82, %c0_83] : memref<448x256xf32, #tpu.memory_space<vmem>>, vector<16x256xf32>
    %206 = arith.mulf %205, %192 : vector<16x256xf32>
    %cst_84 = arith.constant dense<0.000000e+00> : vector<256xf32>
    %207 = vector.multi_reduction <add>, %206, %cst_84 [0] : vector<16x256xf32> to vector<256xf32>
    %208 = vector.shape_cast %207 : vector<256xf32> to vector<1x256xf32>
    %c288_85 = arith.constant 288 : index
    %c0_86 = arith.constant 0 : index
    %209 = vector.load %arg4[%c288_85, %c0_86] : memref<448x256xf32, #tpu.memory_space<vmem>>, vector<16x256xf32>
    %210 = arith.mulf %209, %192 : vector<16x256xf32>
    %cst_87 = arith.constant dense<0.000000e+00> : vector<256xf32>
    %211 = vector.multi_reduction <add>, %210, %cst_87 [0] : vector<16x256xf32> to vector<256xf32>
    %212 = vector.shape_cast %211 : vector<256xf32> to vector<1x256xf32>
    %c352_88 = arith.constant 352 : index
    %c0_89 = arith.constant 0 : index
    %213 = vector.load %arg4[%c352_88, %c0_89] : memref<448x256xf32, #tpu.memory_space<vmem>>, vector<16x256xf32>
    %214 = arith.mulf %213, %192 : vector<16x256xf32>
    %cst_90 = arith.constant dense<0.000000e+00> : vector<256xf32>
    %215 = vector.multi_reduction <add>, %214, %cst_90 [0] : vector<16x256xf32> to vector<256xf32>
    %216 = vector.shape_cast %215 : vector<256xf32> to vector<1x256xf32>
    %c416_91 = arith.constant 416 : index
    %c0_92 = arith.constant 0 : index
    %217 = vector.load %arg4[%c416_91, %c0_92] : memref<448x256xf32, #tpu.memory_space<vmem>>, vector<16x256xf32>
    %218 = arith.mulf %217, %192 : vector<16x256xf32>
    %cst_93 = arith.constant dense<0.000000e+00> : vector<256xf32>
    %219 = vector.multi_reduction <add>, %218, %cst_93 [0] : vector<16x256xf32> to vector<256xf32>
    %220 = vector.shape_cast %219 : vector<256xf32> to vector<1x256xf32>
    %221 = arith.maximumf %196, %200 : vector<1x256xf32>
    %222 = arith.maximumf %221, %204 : vector<1x256xf32>
    %223 = arith.maximumf %222, %208 : vector<1x256xf32>
    %224 = arith.maximumf %223, %212 : vector<1x256xf32>
    %225 = arith.maximumf %224, %216 : vector<1x256xf32>
    %226 = arith.maximumf %225, %220 : vector<1x256xf32>
    %227 = arith.subf %196, %226 : vector<1x256xf32>
    %228 = math.exp %227 : vector<1x256xf32>
    %229 = arith.subf %200, %226 : vector<1x256xf32>
    %230 = math.exp %229 : vector<1x256xf32>
    %231 = arith.subf %204, %226 : vector<1x256xf32>
    %232 = math.exp %231 : vector<1x256xf32>
    %233 = arith.subf %208, %226 : vector<1x256xf32>
    %234 = math.exp %233 : vector<1x256xf32>
    %235 = arith.subf %212, %226 : vector<1x256xf32>
    %236 = math.exp %235 : vector<1x256xf32>
    %237 = arith.subf %216, %226 : vector<1x256xf32>
    %238 = math.exp %237 : vector<1x256xf32>
    %239 = arith.subf %220, %226 : vector<1x256xf32>
    %240 = math.exp %239 : vector<1x256xf32>
    %241 = arith.addf %228, %230 : vector<1x256xf32>
    %242 = arith.addf %241, %232 : vector<1x256xf32>
    %243 = arith.addf %242, %234 : vector<1x256xf32>
    %244 = arith.addf %243, %236 : vector<1x256xf32>
    %245 = arith.addf %244, %238 : vector<1x256xf32>
    %246 = arith.addf %245, %240 : vector<1x256xf32>
    %247 = tpu.reciprocal %246 {approx = true} : vector<1x256xf32> -> vector<1x256xf32>
    %248 = arith.mulf %246, %247 : vector<1x256xf32>
    %cst_94 = arith.constant 2.000000e+00 : f32
    %249 = vector.broadcast %cst_94 : f32 to vector<1x256xf32>
    %250 = arith.subf %249, %248 : vector<1x256xf32>
    %251 = arith.mulf %247, %250 : vector<1x256xf32>
    %252 = arith.mulf %246, %251 : vector<1x256xf32>
    %cst_95 = arith.constant 2.000000e+00 : f32
    %253 = vector.broadcast %cst_95 : f32 to vector<1x256xf32>
    %254 = arith.subf %253, %252 : vector<1x256xf32>
    %255 = arith.mulf %251, %254 : vector<1x256xf32>
    %c0_96 = arith.constant 0 : index
    %c0_97 = arith.constant 0 : index
    %256 = vector.load %arg4[%c0_96, %c0_97] : memref<448x256xf32, #tpu.memory_space<vmem>>, vector<32x256xf32>
    %257 = vector.broadcast %228 : vector<1x256xf32> to vector<32x256xf32>
    %258 = arith.mulf %257, %256 : vector<32x256xf32>
    %c64_98 = arith.constant 64 : index
    %c0_99 = arith.constant 0 : index
    %259 = vector.load %arg4[%c64_98, %c0_99] : memref<448x256xf32, #tpu.memory_space<vmem>>, vector<32x256xf32>
    %260 = vector.broadcast %230 : vector<1x256xf32> to vector<32x256xf32>
    %261 = arith.mulf %260, %259 : vector<32x256xf32>
    %262 = arith.addf %258, %261 : vector<32x256xf32>
    %c128_100 = arith.constant 128 : index
    %c0_101 = arith.constant 0 : index
    %263 = vector.load %arg4[%c128_100, %c0_101] : memref<448x256xf32, #tpu.memory_space<vmem>>, vector<32x256xf32>
    %264 = vector.broadcast %232 : vector<1x256xf32> to vector<32x256xf32>
    %265 = arith.mulf %264, %263 : vector<32x256xf32>
    %266 = arith.addf %262, %265 : vector<32x256xf32>
    %c192_102 = arith.constant 192 : index
    %c0_103 = arith.constant 0 : index
    %267 = vector.load %arg4[%c192_102, %c0_103] : memref<448x256xf32, #tpu.memory_space<vmem>>, vector<32x256xf32>
    %268 = vector.broadcast %234 : vector<1x256xf32> to vector<32x256xf32>
    %269 = arith.mulf %268, %267 : vector<32x256xf32>
    %270 = arith.addf %266, %269 : vector<32x256xf32>
    %c256_104 = arith.constant 256 : index
    %c0_105 = arith.constant 0 : index
    %271 = vector.load %arg4[%c256_104, %c0_105] : memref<448x256xf32, #tpu.memory_space<vmem>>, vector<32x256xf32>
    %272 = vector.broadcast %236 : vector<1x256xf32> to vector<32x256xf32>
    %273 = arith.mulf %272, %271 : vector<32x256xf32>
    %274 = arith.addf %270, %273 : vector<32x256xf32>
    %c320_106 = arith.constant 320 : index
    %c0_107 = arith.constant 0 : index
    %275 = vector.load %arg4[%c320_106, %c0_107] : memref<448x256xf32, #tpu.memory_space<vmem>>, vector<32x256xf32>
    %276 = vector.broadcast %238 : vector<1x256xf32> to vector<32x256xf32>
    %277 = arith.mulf %276, %275 : vector<32x256xf32>
    %278 = arith.addf %274, %277 : vector<32x256xf32>
    %c384_108 = arith.constant 384 : index
    %c0_109 = arith.constant 0 : index
    %279 = vector.load %arg4[%c384_108, %c0_109] : memref<448x256xf32, #tpu.memory_space<vmem>>, vector<32x256xf32>
    %280 = vector.broadcast %240 : vector<1x256xf32> to vector<32x256xf32>
    %281 = arith.mulf %280, %279 : vector<32x256xf32>
    %282 = arith.addf %278, %281 : vector<32x256xf32>
    %283 = vector.broadcast %255 : vector<1x256xf32> to vector<32x256xf32>
    %284 = arith.mulf %282, %283 : vector<32x256xf32>
    %c64_110 = arith.constant 64 : index
    %c0_111 = arith.constant 0 : index
    %285 = vector.load %arg3[%c64_110, %c0_111] : memref<96x256xf32, #tpu.memory_space<vmem>>, vector<32x256xf32>
    tpu.vector_store %arg3[%c64_110, %c0_111], %284 {strides = array<i32>} : memref<96x256xf32, #tpu.memory_space<vmem>>, vector<32x256xf32>,
    return
  }
  func.func @transform_0(%arg0: i32) -> (i32, i32) {
    %c0_i32 = arith.constant 0 : i32
    %c0_i32_0 = arith.constant 0 : i32
    %c0_i32_1 = arith.constant 0 : i32
    return %c0_i32, %c0_i32_0 : i32, i32
  }
  func.func @transform_1(%arg0: i32) -> (i32, i32) {
    %c0_i32 = arith.constant 0 : i32
    %c0_i32_0 = arith.constant 0 : i32
    return %c0_i32, %arg0 : i32, i32
  }
  func.func @transform_2(%arg0: i32) -> (i32, i32) {
    %c0_i32 = arith.constant 0 : i32
    %c0_i32_0 = arith.constant 0 : i32
    return %c0_i32, %arg0 : i32, i32
  }
}

</mosaic_0001>

<llo_original>
// kernel: tpu_custom_call.1
$region0: #{tpu_custom_call.1}
  #allocation0 [shape = 'u32[]', space=smem, size = 0x4, offset = 0x4, fixed_abs, tag = 'smem constant byte address 0x4 - core index']
  #allocation1 [shape = 'u32[72,128]{1,0:T(1,128)}', space=vmem, size = 0x9000, scoped, tag = 'internal scratch']
  #allocation2 [shape = 'f32[448,256]{1,0:T(8,128)}', space=vmem, size = 0x70000, scoped, tag = 'scratch operand']
  %s0 = inlined_call_operand.vmem [shape: f32[448,196], index: 0, kind: input, shape index: {}]
  %s1 = inlined_call_operand.vmem [shape: f32[196,256], index: 1, kind: input, shape index: {}]
  %s2 = inlined_call_operand.hbm [shape: f32[96,256], index: 2, kind: output, shape index: {}]
  %s3 = sld [smem:[#allocation0]]
  $region18: #{tpu_custom_call.1} parent=0
    _
  %s5 = ssub.s32 1, %s3
  %s6 = scalar_select 0, %s5, %s3
  $region1: #{tpu_custom_call.1} parent=0
    #allocation3 [shape = 'u8[98304]{0}', space=vmem, size = 0x18000, scoped, tag = 'output window, operand 0, single buffered']
    #allocation4 [shape = 's32[1]{0}', space=sflag, size = 0x4, scoped, tag = 'scoped memory for tpu_custom_call.1']
    %7 = vsyncpa [#allocation4], 0
    // Predicated region
    $region2: #{tpu_custom_call.1} parent=1 // pred_check
      _
    $region3: #{tpu_custom_call.1} parent=1 // pred_check_branch
      %9 = sbr.rel (0) target = $region5
    $region4: #{tpu_custom_call.1} parent=1 // pred_region
      _
    $region5: #{tpu_custom_call.1} parent=1 // pred_fallthru
      _
    // Predicated region
    $region6: #{tpu_custom_call.1} parent=1 // pred_check
      _
    $region7: #{tpu_custom_call.1} parent=1 // pred_check_branch
      %11 = sbr.rel (0) target = $region9
    $region8: #{tpu_custom_call.1} parent=1 // pred_region
      _
    $region9: #{tpu_custom_call.1} parent=1 // pred_fallthru
      _
    %v12 = vld [vmem:[%s0] sm:$0xff]
    %v13 = vld [vmem:[%s0 + $0x8] sm:$0xff]
    %v14 = vld [vmem:[%s0 + $0x10] sm:$0xff]
    %v15 = vld [vmem:[%s0 + $0x18] sm:$0xff]
    %v16 = vld [vmem:[%s0 + $0x20] sm:$0xff]
    %v17 = vld [vmem:[%s0 + $0x28] sm:$0xff]
    %v18 = vld [vmem:[%s0 + $0x30] sm:$0xff]
    %v19 = vld [vmem:[%s0 + $0x38] sm:$0xff]
    %v20 = vld [vmem:[%s0 + $0x40] sm:$0xff]
    %v21 = vld [vmem:[%s0 + $0x48] sm:$0xff]
    %v22 = vld [vmem:[%s0 + $0x50] sm:$0xff]
    %v23 = vld [vmem:[%s0 + $0x58] sm:$0xff]
    %v24 = vld [vmem:[%s0 + $0x60] sm:$0xff]
    %v25 = vld [vmem:[%s0 + $0x68] sm:$0xff]
    %v26 = vld [vmem:[%s0 + $0x70] sm:$0xff]
    %v27 = vld [vmem:[%s0 + $0x78] sm:$0xff]
    %v28 = vld [vmem:[%s0 + $0x80] sm:$0xff]
    %v29 = vld [vmem:[%s0 + $0x88] sm:$0xff]
    %v30 = vld [vmem:[%s0 + $0x90] sm:$0xff]
    %v31 = vld [vmem:[%s0 + $0x98] sm:$0xff]
    %v32 = vld [vmem:[%s0 + $0xa0] sm:$0xff]
    %v33 = vld [vmem:[%s0 + $0xa8] sm:$0xff]
    %v34 = vld [vmem:[%s0 + $0xb0] sm:$0xff]
    %v35 = vld [vmem:[%s0 + $0xb8] sm:$0xff]
    %v36 = vld [vmem:[%s0 + $0xc0] sm:$0xff]
    %v37 = vld [vmem:[%s0 + $0xc8] sm:$0xff]
    %v38 = vld [vmem:[%s0 + $0xd0] sm:$0xff]
    %v39 = vld [vmem:[%s0 + $0xd8] sm:$0xff]
    %v40 = vld [vmem:[%s0 + $0xe0] sm:$0xff]
    %v41 = vld [vmem:[%s0 + $0xe8] sm:$0xff]
    %v42 = vld [vmem:[%s0 + $0xf0] sm:$0xff]
    %v43 = vld [vmem:[%s0 + $0xf8] sm:$0xff]
    %v44 = vld [vmem:[%s0 + $0x100] sm:$0xff]
    %v45 = vld [vmem:[%s0 + $0x108] sm:$0xff]
    %v46 = vld [vmem:[%s0 + $0x110] sm:$0xff]
    %v47 = vld [vmem:[%s0 + $0x118] sm:$0xff]
    %v48 = vld [vmem:[%s0 + $0x120] sm:$0xff]
    %v49 = vld [vmem:[%s0 + $0x128] sm:$0xff]
    %v50 = vld [vmem:[%s0 + $0x130] sm:$0xff]
    %v51 = vld [vmem:[%s0 + $0x138] sm:$0xff]
    %v52 = vld [vmem:[%s0 + $0x140] sm:$0xff]
    %v53 = vld [vmem:[%s0 + $0x148] sm:$0xff]
    %v54 = vld [vmem:[%s0 + $0x150] sm:$0xff]
    %v55 = vld [vmem:[%s0 + $0x158] sm:$0xff]
    %v56 = vld [vmem:[%s0 + $0x160] sm:$0xff]
    %v57 = vld [vmem:[%s0 + $0x168] sm:$0xff]
    %v58 = vld [vmem:[%s0 + $0x170] sm:$0xff]
    %v59 = vld [vmem:[%s0 + $0x178] sm:$0xff]
    %v60 = vld [vmem:[%s0 + $0x180] sm:$0xff]
    %v61 = vld [vmem:[%s0 + $0x188] sm:$0xff]
    %v62 = vld [vmem:[%s0 + $0x190] sm:$0xff]
    %v63 = vld [vmem:[%s0 + $0x198] sm:$0xff]
    %v64 = vld [vmem:[%s0 + $0x1a0] sm:$0xff]
    %v65 = vld [vmem:[%s0 + $0x1a8] sm:$0xff]
    %v66 = vld [vmem:[%s0 + $0x1b0] sm:$0xff]
    %v67 = vld [vmem:[%s0 + $0x1b8] sm:$0xff]
    %v68 = vld [vmem:[%s0 + $0x1c0] sm:$0xff]
    %v69 = vld [vmem:[%s0 + $0x1c8] sm:$0xff]
    %v70 = vld [vmem:[%s0 + $0x1d0] sm:$0xff]
    %v71 = vld [vmem:[%s0 + $0x1d8] sm:$0xff]
    %v72 = vld [vmem:[%s0 + $0x1e0] sm:$0xff]
    %v73 = vld [vmem:[%s0 + $0x1e8] sm:$0xff]
    %v74 = vld [vmem:[%s0 + $0x1f0] sm:$0xff]
    %v75 = vld [vmem:[%s0 + $0x1f8] sm:$0xff]
    %v76 = vld [vmem:[%s0 + $0x200] sm:$0xff]
    %v77 = vld [vmem:[%s0 + $0x208] sm:$0xff]
    %v78 = vld [vmem:[%s0 + $0x210] sm:$0xff]
    %v79 = vld [vmem:[%s0 + $0x218] sm:$0xff]
    %v80 = vld [vmem:[%s0 + $0x220] sm:$0xff]
    %v81 = vld [vmem:[%s0 + $0x228] sm:$0xff]
    %v82 = vld [vmem:[%s0 + $0x230] sm:$0xff]
    %v83 = vld [vmem:[%s0 + $0x238] sm:$0xff]
    %v84 = vld [vmem:[%s0 + $0x240] sm:$0xff]
    %v85 = vld [vmem:[%s0 + $0x248] sm:$0xff]
    %v86 = vld [vmem:[%s0 + $0x250] sm:$0xff]
    %v87 = vld [vmem:[%s0 + $0x258] sm:$0xff]
    %v88 = vld [vmem:[%s0 + $0x260] sm:$0xff]
    %v89 = vld [vmem:[%s0 + $0x268] sm:$0xff]
    %v90 = vld [vmem:[%s0 + $0x270] sm:$0xff]
    %v91 = vld [vmem:[%s0 + $0x278] sm:$0xff]
    %v92 = vld [vmem:[%s0 + $0x280] sm:$0xff]
    %v93 = vld [vmem:[%s0 + $0x288] sm:$0xff]
    %v94 = vld [vmem:[%s0 + $0x290] sm:$0xff]
    %v95 = vld [vmem:[%s0 + $0x298] sm:$0xff]
    %v96 = vld [vmem:[%s0 + $0x2a0] sm:$0xff]
    %v97 = vld [vmem:[%s0 + $0x2a8] sm:$0xff]
    %v98 = vld [vmem:[%s0 + $0x2b0] sm:$0xff]
    %v99 = vld [vmem:[%s0 + $0x2b8] sm:$0xff]
    %v100 = vld [vmem:[%s0 + $0x2c0] sm:$0xff]
    %v101 = vld [vmem:[%s0 + $0x2c8] sm:$0xff]
    %v102 = vld [vmem:[%s0 + $0x2d0] sm:$0xff]
    %v103 = vld [vmem:[%s0 + $0x2d8] sm:$0xff]
    %v104 = vld [vmem:[%s0 + $0x2e0] sm:$0xff]
    %v105 = vld [vmem:[%s0 + $0x2e8] sm:$0xff]
    %v106 = vld [vmem:[%s0 + $0x2f0] sm:$0xff]
    %v107 = vld [vmem:[%s0 + $0x2f8] sm:$0xff]
    %v108 = vld [vmem:[%s0 + $0x300] sm:$0xff]
    %v109 = vld [vmem:[%s0 + $0x308] sm:$0xff]
    %v110 = vld [vmem:[%s0 + $0x310] sm:$0xff]
    %v111 = vld [vmem:[%s0 + $0x318] sm:$0xff]
    %v112 = vld [vmem:[%s0 + $0x320] sm:$0xff]
    %v113 = vld [vmem:[%s0 + $0x328] sm:$0xff]
    %v114 = vld [vmem:[%s0 + $0x330] sm:$0xff]
    %v115 = vld [vmem:[%s0 + $0x338] sm:$0xff]
    %v116 = vld [vmem:[%s0 + $0x340] sm:$0xff]
    %v117 = vld [vmem:[%s0 + $0x348] sm:$0xff]
    %v118 = vld [vmem:[%s0 + $0x350] sm:$0xff]
    %v119 = vld [vmem:[%s0 + $0x358] sm:$0xff]
    %v120 = vld [vmem:[%s0 + $0x360] sm:$0xff]
    %v121 = vld [vmem:[%s0 + $0x368] sm:$0xff]
    %v122 = vld [vmem:[%s0 + $0x370] sm:$0xff]
    %v123 = vld [vmem:[%s0 + $0x378] sm:$0xff]
    %v124 = vld [vmem:[%s1] sm:$0xff]
    %v125 = vld [vmem:[%s1 + $0x8] sm:$0xff]
    %v126 = vld [vmem:[%s1 + $0x10] sm:$0xff]
    %v127 = vld [vmem:[%s1 + $0x18] sm:$0xff]
    %v128 = vld [vmem:[%s1 + $0x20] sm:$0xff]
    %v129 = vld [vmem:[%s1 + $0x28] sm:$0xff]
    %v130 = vld [vmem:[%s1 + $0x30] sm:$0xff]
    %v131 = vld [vmem:[%s1 + $0x38] sm:$0xff]
    %v132 = vld [vmem:[%s1 + $0x40] sm:$0xff]
    %v133 = vld [vmem:[%s1 + $0x48] sm:$0xff]
    %v134 = vld [vmem:[%s1 + $0x50] sm:$0xff]
    %v135 = vld [vmem:[%s1 + $0x58] sm:$0xff]
    %v136 = vld [vmem:[%s1 + $0x60] sm:$0xff]
    %v137 = vld [vmem:[%s1 + $0x68] sm:$0xff]
    %v138 = vld [vmem:[%s1 + $0x70] sm:$0xff]
    %v139 = vld [vmem:[%s1 + $0x78] sm:$0xff]
    %v140 = vld [vmem:[%s1 + $0x80] sm:$0xff]
    %v141 = vld [vmem:[%s1 + $0x88] sm:$0xff]
    %v142 = vld [vmem:[%s1 + $0x90] sm:$0xff]
    %v143 = vld [vmem:[%s1 + $0x98] sm:$0xff]
    %v144 = vld [vmem:[%s1 + $0xa0] sm:$0xff]
    %v145 = vld [vmem:[%s1 + $0xa8] sm:$0xff]
    %v146 = vld [vmem:[%s1 + $0xb0] sm:$0xff]
    %v147 = vld [vmem:[%s1 + $0xb8] sm:$0xff]
    %v148 = vld [vmem:[%s1 + $0xc0] sm:$0xff]
    %v149 = vld [vmem:[%s1 + $0xc8] sm:$0xff]
    %v150 = vld [vmem:[%s1 + $0xd0] sm:$0xff]
    %v151 = vld [vmem:[%s1 + $0xd8] sm:$0xff]
    %v152 = vld [vmem:[%s1 + $0xe0] sm:$0xff]
    %v153 = vld [vmem:[%s1 + $0xe8] sm:$0xff]
    %v154 = vld [vmem:[%s1 + $0xf0] sm:$0xff]
    %v155 = vld [vmem:[%s1 + $0xf8] sm:$0xff]
    %v156 = vld [vmem:[%s1 + $0x100] sm:$0xff]
    %v157 = vld [vmem:[%s1 + $0x108] sm:$0xff]
    %v158 = vld [vmem:[%s1 + $0x110] sm:$0xff]
    %v159 = vld [vmem:[%s1 + $0x118] sm:$0xff]
    %v160 = vld [vmem:[%s1 + $0x120] sm:$0xff]
    %v161 = vld [vmem:[%s1 + $0x128] sm:$0xff]
    %v162 = vld [vmem:[%s1 + $0x130] sm:$0xff]
    %v163 = vld [vmem:[%s1 + $0x138] sm:$0xff]
    %v164 = vld [vmem:[%s1 + $0x140] sm:$0xff]
    %v165 = vld [vmem:[%s1 + $0x148] sm:$0xff]
    %v166 = vld [vmem:[%s1 + $0x150] sm:$0xff]
    %v167 = vld [vmem:[%s1 + $0x158] sm:$0xff]
    %v168 = vld [vmem:[%s1 + $0x160] sm:$0xff]
    %v169 = vld [vmem:[%s1 + $0x168] sm:$0xff]
    %v170 = vld [vmem:[%s1 + $0x170] sm:$0xff]
    %v171 = vld [vmem:[%s1 + $0x178] sm:$0xff]
    %v172 = vld [vmem:[%s1 + $0x180] sm:$0xf]
    %v173 = vld [vmem:[%s1 + $0x188] sm:$0xf]
    %vm174 = vcmask 556032
    %v176 = vsel %vm174, %v13, 0
    %v179 = vsel %vm174, %v15, 0
    %v182 = vsel %vm174, %v17, 0
    %v185 = vsel %vm174, %v19, 0
    %v188 = vsel %vm174, %v21, 0
    %v191 = vsel %vm174, %v23, 0
    %v194 = vsel %vm174, %v25, 0
    %v197 = vsel %vm174, %v27, 0
    %v200 = vsel %vm174, %v29, 0
    %v203 = vsel %vm174, %v31, 0
    %v206 = vsel %vm174, %v33, 0
    %v209 = vsel %vm174, %v35, 0
    %v212 = vsel %vm174, %v37, 0
    %v215 = vsel %vm174, %v39, 0
    %v218 = vsel %vm174, %v41, 0
    %v221 = vsel %vm174, %v43, 0
    %v224 = vsel %vm174, %v45, 0
    %v227 = vsel %vm174, %v47, 0
    %v230 = vsel %vm174, %v49, 0
    %v233 = vsel %vm174, %v51, 0
    %v236 = vsel %vm174, %v53, 0
    %v239 = vsel %vm174, %v55, 0
    %v242 = vsel %vm174, %v57, 0
    %v245 = vsel %vm174, %v59, 0
    %v248 = vsel %vm174, %v61, 0
    %v251 = vsel %vm174, %v63, 0
    %v254 = vsel %vm174, %v65, 0
    %v257 = vsel %vm174, %v67, 0
    %v260 = vsel %vm174, %v69, 0
    %v263 = vsel %vm174, %v71, 0
    %v266 = vsel %vm174, %v73, 0
    %v269 = vsel %vm174, %v75, 0
    %v272 = vsel %vm174, %v77, 0
    %v275 = vsel %vm174, %v79, 0
    %v278 = vsel %vm174, %v81, 0
    %v281 = vsel %vm174, %v83, 0
    %v284 = vsel %vm174, %v85, 0
    %v287 = vsel %vm174, %v87, 0
    %v290 = vsel %vm174, %v89, 0
    %v293 = vsel %vm174, %v91, 0
    %v296 = vsel %vm174, %v93, 0
    %v299 = vsel %vm174, %v95, 0
    %v302 = vsel %vm174, %v97, 0
    %v305 = vsel %vm174, %v99, 0
    %v308 = vsel %vm174, %v101, 0
    %v311 = vsel %vm174, %v103, 0
    %v314 = vsel %vm174, %v105, 0
    %v317 = vsel %vm174, %v107, 0
    %v320 = vsel %vm174, %v109, 0
    %v323 = vsel %vm174, %v111, 0
    %v326 = vsel %vm174, %v113, 0
    %v329 = vsel %vm174, %v115, 0
    %v332 = vsel %vm174, %v117, 0
    %v335 = vsel %vm174, %v119, 0
    %v338 = vsel %vm174, %v121, 0
    %v341 = vsel %vm174, %v123, 0
    %vm343 = vcmask 1043456
    %v345 = vsel %vm343, %v172, 0
    %v348 = vsel %vm343, %v173, 0
    %350 = vmatpush.msra.mxu0 %v154
    %351 = vmatpush.msra.mxu0 %v152
    %352 = vmatpush.msra.mxu0 %v150
    %353 = vmatpush.msra.mxu0 %v148
    %354 = vmatpush.msra.mxu0 %v146
    %355 = vmatpush.msra.mxu0 %v144
    %356 = vmatpush.msra.mxu0 %v142
    %357 = vmatpush.msra.mxu0 %v140
    %358 = vmatpush.msra.mxu0 %v138
    %359 = vmatpush.msra.mxu0 %v136
    %360 = vmatpush.msra.mxu0 %v134
    %361 = vmatpush.msra.mxu0 %v132
    %362 = vmatpush.msra.mxu0 %v130
    %363 = vmatpush.msra.mxu0 %v128
    %364 = vmatpush.msra.mxu0 %v126
    %365 = vmatpush.msra.mxu0 %v124
    %366 = vmatmul.f32.gmra.mxu0 %v12
    %v367 = vpop.f32.mrf.mxu0
    %v368 = vadd.f32 0.0, %v367
    %369 = vmatmul.f32.gmra.mxu0 %v14
    %v370 = vpop.f32.mrf.mxu0
    %v371 = vadd.f32 0.0, %v370
    %372 = vmatmul.f32.gmra.mxu0 %v16
    %v373 = vpop.f32.mrf.mxu0
    %v374 = vadd.f32 0.0, %v373
    %375 = vmatmul.f32.gmra.mxu0 %v18
    %v376 = vpop.f32.mrf.mxu0
    %v377 = vadd.f32 0.0, %v376
    %378 = vmatmul.f32.gmra.mxu0 %v20
    %v379 = vpop.f32.mrf.mxu0
    %v380 = vadd.f32 0.0, %v379
    %381 = vmatmul.f32.gmra.mxu0 %v22
    %v382 = vpop.f32.mrf.mxu0
    %v383 = vadd.f32 0.0, %v382
    %384 = vmatmul.f32.gmra.mxu0 %v24
    %v385 = vpop.f32.mrf.mxu0
    %v386 = vadd.f32 0.0, %v385
    %387 = vmatmul.f32.gmra.mxu0 %v26
    %v388 = vpop.f32.mrf.mxu0
    %v389 = vadd.f32 0.0, %v388
    %390 = vmatmul.f32.gmra.mxu0 %v28
    %v391 = vpop.f32.mrf.mxu0
    %v392 = vadd.f32 0.0, %v391
    %393 = vmatmul.f32.gmra.mxu0 %v30
    %v394 = vpop.f32.mrf.mxu0
    %v395 = vadd.f32 0.0, %v394
    %396 = vmatmul.f32.gmra.mxu0 %v32
    %v397 = vpop.f32.mrf.mxu0
    %v398 = vadd.f32 0.0, %v397
    %399 = vmatmul.f32.gmra.mxu0 %v34
    %v400 = vpop.f32.mrf.mxu0
    %v401 = vadd.f32 0.0, %v400
    %402 = vmatmul.f32.gmra.mxu0 %v36
    %v403 = vpop.f32.mrf.mxu0
    %v404 = vadd.f32 0.0, %v403
    %405 = vmatmul.f32.gmra.mxu0 %v38
    %v406 = vpop.f32.mrf.mxu0
    %v407 = vadd.f32 0.0, %v406
    %408 = vmatmul.f32.gmra.mxu0 %v40
    %v409 = vpop.f32.mrf.mxu0
    %v410 = vadd.f32 0.0, %v409
    %411 = vmatmul.f32.gmra.mxu0 %v42
    %v412 = vpop.f32.mrf.mxu0
    %v413 = vadd.f32 0.0, %v412
    %414 = vmatmul.f32.gmra.mxu0 %v44
    %v415 = vpop.f32.mrf.mxu0
    %v416 = vadd.f32 0.0, %v415
    %417 = vmatmul.f32.gmra.mxu0 %v46
    %v418 = vpop.f32.mrf.mxu0
    %v419 = vadd.f32 0.0, %v418
    %420 = vmatmul.f32.gmra.mxu0 %v48
    %v421 = vpop.f32.mrf.mxu0
    %v422 = vadd.f32 0.0, %v421
    %423 = vmatmul.f32.gmra.mxu0 %v50
    %v424 = vpop.f32.mrf.mxu0
    %v425 = vadd.f32 0.0, %v424
    %426 = vmatmul.f32.gmra.mxu0 %v52
    %v427 = vpop.f32.mrf.mxu0
    %v428 = vadd.f32 0.0, %v427
    %429 = vmatmul.f32.gmra.mxu0 %v54
    %v430 = vpop.f32.mrf.mxu0
    %v431 = vadd.f32 0.0, %v430
    %432 = vmatmul.f32.gmra.mxu0 %v56
    %v433 = vpop.f32.mrf.mxu0
    %v434 = vadd.f32 0.0, %v433
    %435 = vmatmul.f32.gmra.mxu0 %v58
    %v436 = vpop.f32.mrf.mxu0
    %v437 = vadd.f32 0.0, %v436
    %438 = vmatmul.f32.gmra.mxu0 %v60
    %v439 = vpop.f32.mrf.mxu0
    %v440 = vadd.f32 0.0, %v439
    %441 = vmatmul.f32.gmra.mxu0 %v62
    %v442 = vpop.f32.mrf.mxu0
    %v443 = vadd.f32 0.0, %v442
    %444 = vmatmul.f32.gmra.mxu0 %v64
    %v445 = vpop.f32.mrf.mxu0
    %v446 = vadd.f32 0.0, %v445
    %447 = vmatmul.f32.gmra.mxu0 %v66
    %v448 = vpop.f32.mrf.mxu0
    %v449 = vadd.f32 0.0, %v448
    %450 = vmatmul.f32.gmra.mxu0 %v68
    %v451 = vpop.f32.mrf.mxu0
    %v452 = vadd.f32 0.0, %v451
    %453 = vmatmul.f32.gmra.mxu0 %v70
    %v454 = vpop.f32.mrf.mxu0
    %v455 = vadd.f32 0.0, %v454
    %456 = vmatmul.f32.gmra.mxu0 %v72
    %v457 = vpop.f32.mrf.mxu0
    %v458 = vadd.f32 0.0, %v457
    %459 = vmatmul.f32.gmra.mxu0 %v74
    %v460 = vpop.f32.mrf.mxu0
    %v461 = vadd.f32 0.0, %v460
    %462 = vmatmul.f32.gmra.mxu0 %v76
    %v463 = vpop.f32.mrf.mxu0
    %v464 = vadd.f32 0.0, %v463
    %465 = vmatmul.f32.gmra.mxu0 %v78
    %v466 = vpop.f32.mrf.mxu0
    %v467 = vadd.f32 0.0, %v466
    %468 = vmatmul.f32.gmra.mxu0 %v80
    %v469 = vpop.f32.mrf.mxu0
    %v470 = vadd.f32 0.0, %v469
    %471 = vmatmul.f32.gmra.mxu0 %v82
    %v472 = vpop.f32.mrf.mxu0
    %v473 = vadd.f32 0.0, %v472
    %474 = vmatmul.f32.gmra.mxu0 %v84
    %v475 = vpop.f32.mrf.mxu0
    %v476 = vadd.f32 0.0, %v475
    %477 = vmatmul.f32.gmra.mxu0 %v86
    %v478 = vpop.f32.mrf.mxu0
    %v479 = vadd.f32 0.0, %v478
    %480 = vmatmul.f32.gmra.mxu0 %v88
    %v481 = vpop.f32.mrf.mxu0
    %v482 = vadd.f32 0.0, %v481
    %483 = vmatmul.f32.gmra.mxu0 %v90
    %v484 = vpop.f32.mrf.mxu0
    %v485 = vadd.f32 0.0, %v484
    %486 = vmatmul.f32.gmra.mxu0 %v92
    %v487 = vpop.f32.mrf.mxu0
    %v488 = vadd.f32 0.0, %v487
    %489 = vmatmul.f32.gmra.mxu0 %v94
    %v490 = vpop.f32.mrf.mxu0
    %v491 = vadd.f32 0.0, %v490
    %492 = vmatmul.f32.gmra.mxu0 %v96
    %v493 = vpop.f32.mrf.mxu0
    %v494 = vadd.f32 0.0, %v493
    %495 = vmatmul.f32.gmra.mxu0 %v98
    %v496 = vpop.f32.mrf.mxu0
    %v497 = vadd.f32 0.0, %v496
    %498 = vmatmul.f32.gmra.mxu0 %v100
    %v499 = vpop.f32.mrf.mxu0
    %v500 = vadd.f32 0.0, %v499
    %501 = vmatmul.f32.gmra.mxu0 %v102
    %v502 = vpop.f32.mrf.mxu0
    %v503 = vadd.f32 0.0, %v502
    %504 = vmatmul.f32.gmra.mxu0 %v104
    %v505 = vpop.f32.mrf.mxu0
    %v506 = vadd.f32 0.0, %v505
    %507 = vmatmul.f32.gmra.mxu0 %v106
    %v508 = vpop.f32.mrf.mxu0
    %v509 = vadd.f32 0.0, %v508
    %510 = vmatmul.f32.gmra.mxu0 %v108
    %v511 = vpop.f32.mrf.mxu0
    %v512 = vadd.f32 0.0, %v511
    %513 = vmatmul.f32.gmra.mxu0 %v110
    %v514 = vpop.f32.mrf.mxu0
    %v515 = vadd.f32 0.0, %v514
    %516 = vmatmul.f32.gmra.mxu0 %v112
    %v517 = vpop.f32.mrf.mxu0
    %v518 = vadd.f32 0.0, %v517
    %519 = vmatmul.f32.gmra.mxu0 %v114
    %v520 = vpop.f32.mrf.mxu0
    %v521 = vadd.f32 0.0, %v520
    %522 = vmatmul.f32.gmra.mxu0 %v116
    %v523 = vpop.f32.mrf.mxu0
    %v524 = vadd.f32 0.0, %v523
    %525 = vmatmul.f32.gmra.mxu0 %v118
    %v526 = vpop.f32.mrf.mxu0
    %v527 = vadd.f32 0.0, %v526
    %528 = vmatmul.f32.gmra.mxu0 %v120
    %v529 = vpop.f32.mrf.mxu0
    %v530 = vadd.f32 0.0, %v529
    %531 = vmatmul.f32.gmra.mxu0 %v122
    %v532 = vpop.f32.mrf.mxu0
    %v533 = vadd.f32 0.0, %v532
    %534 = vdwg.mxu0
    %535 = vmatpush.msra.mxu0 0.0
    %536 = vmatpush.msra.mxu0 0.0
    %537 = vmatpush.msra.mxu0 0.0
    %538 = vmatpush.msra.mxu0 0.0
    %539 = vmatpush.msra.mxu0 0.0
    %540 = vmatpush.msra.mxu0 0.0
    %541 = vmatpush.msra.mxu0 0.0
    %542 = vmatpush.msra.mxu0 %v345
    %543 = vmatpush.msra.mxu0 %v170
    %544 = vmatpush.msra.mxu0 %v168
    %545 = vmatpush.msra.mxu0 %v166
    %546 = vmatpush.msra.mxu0 %v164
    %547 = vmatpush.msra.mxu0 %v162
    %548 = vmatpush.msra.mxu0 %v160
    %549 = vmatpush.msra.mxu0 %v158
    %550 = vmatpush.msra.mxu0 %v156
    %551 = vmatmul.f32.gmra.mxu0 %v176
    %v552 = vpop.f32.mrf.mxu0
    %v553 = vadd.f32 %v368, %v552
    %554 = vmatmul.f32.gmra.mxu0 %v179
    %v555 = vpop.f32.mrf.mxu0
    %v556 = vadd.f32 %v371, %v555
    %557 = vmatmul.f32.gmra.mxu0 %v182
    %v558 = vpop.f32.mrf.mxu0
    %v559 = vadd.f32 %v374, %v558
    %560 = vmatmul.f32.gmra.mxu0 %v185
    %v561 = vpop.f32.mrf.mxu0
    %v562 = vadd.f32 %v377, %v561
    %563 = vmatmul.f32.gmra.mxu0 %v188
    %v564 = vpop.f32.mrf.mxu0
    %v565 = vadd.f32 %v380, %v564
    %566 = vmatmul.f32.gmra.mxu0 %v191
    %v567 = vpop.f32.mrf.mxu0
    %v568 = vadd.f32 %v383, %v567
    %569 = vmatmul.f32.gmra.mxu0 %v194
    %v570 = vpop.f32.mrf.mxu0
    %v571 = vadd.f32 %v386, %v570
    %572 = vmatmul.f32.gmra.mxu0 %v197
    %v573 = vpop.f32.mrf.mxu0
    %v574 = vadd.f32 %v389, %v573
    %575 = vmatmul.f32.gmra.mxu0 %v200
    %v576 = vpop.f32.mrf.mxu0
    %v577 = vadd.f32 %v392, %v576
    %578 = vmatmul.f32.gmra.mxu0 %v203
    %v579 = vpop.f32.mrf.mxu0
    %v580 = vadd.f32 %v395, %v579
    %581 = vmatmul.f32.gmra.mxu0 %v206
    %v582 = vpop.f32.mrf.mxu0
    %v583 = vadd.f32 %v398, %v582
    %584 = vmatmul.f32.gmra.mxu0 %v209
    %v585 = vpop.f32.mrf.mxu0
    %v586 = vadd.f32 %v401, %v585
    %587 = vmatmul.f32.gmra.mxu0 %v212
    %v588 = vpop.f32.mrf.mxu0
    %v589 = vadd.f32 %v404, %v588
    %590 = vmatmul.f32.gmra.mxu0 %v215
    %v591 = vpop.f32.mrf.mxu0
    %v592 = vadd.f32 %v407, %v591
    %593 = vmatmul.f32.gmra.mxu0 %v218
    %v594 = vpop.f32.mrf.mxu0
    %v595 = vadd.f32 %v410, %v594
    %596 = vmatmul.f32.gmra.mxu0 %v221
    %v597 = vpop.f32.mrf.mxu0
    %v598 = vadd.f32 %v413, %v597
    %599 = vmatmul.f32.gmra.mxu0 %v224
    %v600 = vpop.f32.mrf.mxu0
    %v601 = vadd.f32 %v416, %v600
    %602 = vmatmul.f32.gmra.mxu0 %v227
    %v603 = vpop.f32.mrf.mxu0
    %v604 = vadd.f32 %v419, %v603
    %605 = vmatmul.f32.gmra.mxu0 %v230
    %v606 = vpop.f32.mrf.mxu0
    %v607 = vadd.f32 %v422, %v606
    %608 = vmatmul.f32.gmra.mxu0 %v233
    %v609 = vpop.f32.mrf.mxu0
    %v610 = vadd.f32 %v425, %v609
    %611 = vmatmul.f32.gmra.mxu0 %v236
    %v612 = vpop.f32.mrf.mxu0
    %v613 = vadd.f32 %v428, %v612
    %614 = vmatmul.f32.gmra.mxu0 %v239
    %v615 = vpop.f32.mrf.mxu0
    %v616 = vadd.f32 %v431, %v615
    %617 = vmatmul.f32.gmra.mxu0 %v242
    %v618 = vpop.f32.mrf.mxu0
    %v619 = vadd.f32 %v434, %v618
    %620 = vmatmul.f32.gmra.mxu0 %v245
    %v621 = vpop.f32.mrf.mxu0
    %v622 = vadd.f32 %v437, %v621
    %623 = vmatmul.f32.gmra.mxu0 %v248
    %v624 = vpop.f32.mrf.mxu0
    %v625 = vadd.f32 %v440, %v624
    %626 = vmatmul.f32.gmra.mxu0 %v251
    %v627 = vpop.f32.mrf.mxu0
    %v628 = vadd.f32 %v443, %v627
    %629 = vmatmul.f32.gmra.mxu0 %v254
    %v630 = vpop.f32.mrf.mxu0
    %v631 = vadd.f32 %v446, %v630
    %632 = vmatmul.f32.gmra.mxu0 %v257
    %v633 = vpop.f32.mrf.mxu0
    %v634 = vadd.f32 %v449, %v633
    %635 = vmatmul.f32.gmra.mxu0 %v260
    %v636 = vpop.f32.mrf.mxu0
    %v637 = vadd.f32 %v452, %v636
    %638 = vmatmul.f32.gmra.mxu0 %v263
    %v639 = vpop.f32.mrf.mxu0
    %v640 = vadd.f32 %v455, %v639
    %641 = vmatmul.f32.gmra.mxu0 %v266
    %v642 = vpop.f32.mrf.mxu0
    %v643 = vadd.f32 %v458, %v642
    %644 = vmatmul.f32.gmra.mxu0 %v269
    %v645 = vpop.f32.mrf.mxu0
    %v646 = vadd.f32 %v461, %v645
    %647 = vmatmul.f32.gmra.mxu0 %v272
    %v648 = vpop.f32.mrf.mxu0
    %v649 = vadd.f32 %v464, %v648
    %650 = vmatmul.f32.gmra.mxu0 %v275
    %v651 = vpop.f32.mrf.mxu0
    %v652 = vadd.f32 %v467, %v651
    %653 = vmatmul.f32.gmra.mxu0 %v278
    %v654 = vpop.f32.mrf.mxu0
    %v655 = vadd.f32 %v470, %v654
    %656 = vmatmul.f32.gmra.mxu0 %v281
    %v657 = vpop.f32.mrf.mxu0
    %v658 = vadd.f32 %v473, %v657
    %659 = vmatmul.f32.gmra.mxu0 %v284
    %v660 = vpop.f32.mrf.mxu0
    %v661 = vadd.f32 %v476, %v660
    %662 = vmatmul.f32.gmra.mxu0 %v287
    %v663 = vpop.f32.mrf.mxu0
    %v664 = vadd.f32 %v479, %v663
    %665 = vmatmul.f32.gmra.mxu0 %v290
    %v666 = vpop.f32.mrf.mxu0
    %v667 = vadd.f32 %v482, %v666
    %668 = vmatmul.f32.gmra.mxu0 %v293
    %v669 = vpop.f32.mrf.mxu0
    %v670 = vadd.f32 %v485, %v669
    %671 = vmatmul.f32.gmra.mxu0 %v296
    %v672 = vpop.f32.mrf.mxu0
    %v673 = vadd.f32 %v488, %v672
    %674 = vmatmul.f32.gmra.mxu0 %v299
    %v675 = vpop.f32.mrf.mxu0
    %v676 = vadd.f32 %v491, %v675
    %677 = vmatmul.f32.gmra.mxu0 %v302
    %v678 = vpop.f32.mrf.mxu0
    %v679 = vadd.f32 %v494, %v678
    %680 = vmatmul.f32.gmra.mxu0 %v305
    %v681 = vpop.f32.mrf.mxu0
    %v682 = vadd.f32 %v497, %v681
    %683 = vmatmul.f32.gmra.mxu0 %v308
    %v684 = vpop.f32.mrf.mxu0
    %v685 = vadd.f32 %v500, %v684
    %686 = vmatmul.f32.gmra.mxu0 %v311
    %v687 = vpop.f32.mrf.mxu0
    %v688 = vadd.f32 %v503, %v687
    %689 = vmatmul.f32.gmra.mxu0 %v314
    %v690 = vpop.f32.mrf.mxu0
    %v691 = vadd.f32 %v506, %v690
    %692 = vmatmul.f32.gmra.mxu0 %v317
    %v693 = vpop.f32.mrf.mxu0
    %v694 = vadd.f32 %v509, %v693
    %695 = vmatmul.f32.gmra.mxu0 %v320
    %v696 = vpop.f32.mrf.mxu0
    %v697 = vadd.f32 %v512, %v696
    %698 = vmatmul.f32.gmra.mxu0 %v323
    %v699 = vpop.f32.mrf.mxu0
    %v700 = vadd.f32 %v515, %v699
    %701 = vmatmul.f32.gmra.mxu0 %v326
    %v702 = vpop.f32.mrf.mxu0
    %v703 = vadd.f32 %v518, %v702
    %704 = vmatmul.f32.gmra.mxu0 %v329
    %v705 = vpop.f32.mrf.mxu0
    %v706 = vadd.f32 %v521, %v705
    %707 = vmatmul.f32.gmra.mxu0 %v332
    %v708 = vpop.f32.mrf.mxu0
    %v709 = vadd.f32 %v524, %v708
    %710 = vmatmul.f32.gmra.mxu0 %v335
    %v711 = vpop.f32.mrf.mxu0
    %v712 = vadd.f32 %v527, %v711
    %713 = vmatmul.f32.gmra.mxu0 %v338
    %v714 = vpop.f32.mrf.mxu0
    %v715 = vadd.f32 %v530, %v714
    %716 = vmatmul.f32.gmra.mxu0 %v341
    %v717 = vpop.f32.mrf.mxu0
    %v718 = vadd.f32 %v533, %v717
    %719 = vdwg.mxu0
    %720 = vmatpush.msra.mxu0 %v155
    %721 = vmatpush.msra.mxu0 %v153
    %722 = vmatpush.msra.mxu0 %v151
    %723 = vmatpush.msra.mxu0 %v149
    %724 = vmatpush.msra.mxu0 %v147
    %725 = vmatpush.msra.mxu0 %v145
    %726 = vmatpush.msra.mxu0 %v143
    %727 = vmatpush.msra.mxu0 %v141
    %728 = vmatpush.msra.mxu0 %v139
    %729 = vmatpush.msra.mxu0 %v137
    %730 = vmatpush.msra.mxu0 %v135
    %731 = vmatpush.msra.mxu0 %v133
    %732 = vmatpush.msra.mxu0 %v131
    %733 = vmatpush.msra.mxu0 %v129
    %734 = vmatpush.msra.mxu0 %v127
    %735 = vmatpush.msra.mxu0 %v125
    %736 = vmatmul.f32.gmra.mxu0 %v12
    %v737 = vpop.f32.mrf.mxu0
    %v738 = vadd.f32 0.0, %v737
    %739 = vmatmul.f32.gmra.mxu0 %v14
    %v740 = vpop.f32.mrf.mxu0
    %v741 = vadd.f32 0.0, %v740
    %742 = vmatmul.f32.gmra.mxu0 %v16
    %v743 = vpop.f32.mrf.mxu0
    %v744 = vadd.f32 0.0, %v743
    %745 = vmatmul.f32.gmra.mxu0 %v18
    %v746 = vpop.f32.mrf.mxu0
    %v747 = vadd.f32 0.0, %v746
    %748 = vmatmul.f32.gmra.mxu0 %v20
    %v749 = vpop.f32.mrf.mxu0
    %v750 = vadd.f32 0.0, %v749
    %751 = vmatmul.f32.gmra.mxu0 %v22
    %v752 = vpop.f32.mrf.mxu0
    %v753 = vadd.f32 0.0, %v752
    %754 = vmatmul.f32.gmra.mxu0 %v24
    %v755 = vpop.f32.mrf.mxu0
    %v756 = vadd.f32 0.0, %v755
    %757 = vmatmul.f32.gmra.mxu0 %v26
    %v758 = vpop.f32.mrf.mxu0
    %v759 = vadd.f32 0.0, %v758
    %760 = vmatmul.f32.gmra.mxu0 %v28
    %v761 = vpop.f32.mrf.mxu0
    %v762 = vadd.f32 0.0, %v761
    %763 = vmatmul.f32.gmra.mxu0 %v30
    %v764 = vpop.f32.mrf.mxu0
    %v765 = vadd.f32 0.0, %v764
    %766 = vmatmul.f32.gmra.mxu0 %v32
    %v767 = vpop.f32.mrf.mxu0
    %v768 = vadd.f32 0.0, %v767
    %769 = vmatmul.f32.gmra.mxu0 %v34
    %v770 = vpop.f32.mrf.mxu0
    %v771 = vadd.f32 0.0, %v770
    %772 = vmatmul.f32.gmra.mxu0 %v36
    %v773 = vpop.f32.mrf.mxu0
    %v774 = vadd.f32 0.0, %v773
    %775 = vmatmul.f32.gmra.mxu0 %v38
    %v776 = vpop.f32.mrf.mxu0
    %v777 = vadd.f32 0.0, %v776
    %778 = vmatmul.f32.gmra.mxu0 %v40
    %v779 = vpop.f32.mrf.mxu0
    %v780 = vadd.f32 0.0, %v779
    %781 = vmatmul.f32.gmra.mxu0 %v42
    %v782 = vpop.f32.mrf.mxu0
    %v783 = vadd.f32 0.0, %v782
    %784 = vmatmul.f32.gmra.mxu0 %v44
    %v785 = vpop.f32.mrf.mxu0
    %v786 = vadd.f32 0.0, %v785
    %787 = vmatmul.f32.gmra.mxu0 %v46
    %v788 = vpop.f32.mrf.mxu0
    %v789 = vadd.f32 0.0, %v788
    %790 = vmatmul.f32.gmra.mxu0 %v48
    %v791 = vpop.f32.mrf.mxu0
    %v792 = vadd.f32 0.0, %v791
    %793 = vmatmul.f32.gmra.mxu0 %v50
    %v794 = vpop.f32.mrf.mxu0
    %v795 = vadd.f32 0.0, %v794
    %796 = vmatmul.f32.gmra.mxu0 %v52
    %v797 = vpop.f32.mrf.mxu0
    %v798 = vadd.f32 0.0, %v797
    %799 = vmatmul.f32.gmra.mxu0 %v54
    %v800 = vpop.f32.mrf.mxu0
    %v801 = vadd.f32 0.0, %v800
    %802 = vmatmul.f32.gmra.mxu0 %v56
    %v803 = vpop.f32.mrf.mxu0
    %v804 = vadd.f32 0.0, %v803
    %805 = vmatmul.f32.gmra.mxu0 %v58
    %v806 = vpop.f32.mrf.mxu0
    %v807 = vadd.f32 0.0, %v806
    %808 = vmatmul.f32.gmra.mxu0 %v60
    %v809 = vpop.f32.mrf.mxu0
    %v810 = vadd.f32 0.0, %v809
    %811 = vmatmul.f32.gmra.mxu0 %v62
    %v812 = vpop.f32.mrf.mxu0
    %v813 = vadd.f32 0.0, %v812
    %814 = vmatmul.f32.gmra.mxu0 %v64
    %v815 = vpop.f32.mrf.mxu0
    %v816 = vadd.f32 0.0, %v815
    %817 = vmatmul.f32.gmra.mxu0 %v66
    %v818 = vpop.f32.mrf.mxu0
    %v819 = vadd.f32 0.0, %v818
    %820 = vmatmul.f32.gmra.mxu0 %v68
    %v821 = vpop.f32.mrf.mxu0
    %v822 = vadd.f32 0.0, %v821
    %823 = vmatmul.f32.gmra.mxu0 %v70
    %v824 = vpop.f32.mrf.mxu0
    %v825 = vadd.f32 0.0, %v824
    %826 = vmatmul.f32.gmra.mxu0 %v72
    %v827 = vpop.f32.mrf.mxu0
    %v828 = vadd.f32 0.0, %v827
    %829 = vmatmul.f32.gmra.mxu0 %v74
    %v830 = vpop.f32.mrf.mxu0
    %v831 = vadd.f32 0.0, %v830
    %832 = vmatmul.f32.gmra.mxu0 %v76
    %v833 = vpop.f32.mrf.mxu0
    %v834 = vadd.f32 0.0, %v833
    %835 = vmatmul.f32.gmra.mxu0 %v78
    %v836 = vpop.f32.mrf.mxu0
    %v837 = vadd.f32 0.0, %v836
    %838 = vmatmul.f32.gmra.mxu0 %v80
    %v839 = vpop.f32.mrf.mxu0
    %v840 = vadd.f32 0.0, %v839
    %841 = vmatmul.f32.gmra.mxu0 %v82
    %v842 = vpop.f32.mrf.mxu0
    %v843 = vadd.f32 0.0, %v842
    %844 = vmatmul.f32.gmra.mxu0 %v84
    %v845 = vpop.f32.mrf.mxu0
    %v846 = vadd.f32 0.0, %v845
    %847 = vmatmul.f32.gmra.mxu0 %v86
    %v848 = vpop.f32.mrf.mxu0
    %v849 = vadd.f32 0.0, %v848
    %850 = vmatmul.f32.gmra.mxu0 %v88
    %v851 = vpop.f32.mrf.mxu0
    %v852 = vadd.f32 0.0, %v851
    %853 = vmatmul.f32.gmra.mxu0 %v90
    %v854 = vpop.f32.mrf.mxu0
    %v855 = vadd.f32 0.0, %v854
    %856 = vmatmul.f32.gmra.mxu0 %v92
    %v857 = vpop.f32.mrf.mxu0
    %v858 = vadd.f32 0.0, %v857
    %859 = vmatmul.f32.gmra.mxu0 %v94
    %v860 = vpop.f32.mrf.mxu0
    %v861 = vadd.f32 0.0, %v860
    %862 = vmatmul.f32.gmra.mxu0 %v96
    %v863 = vpop.f32.mrf.mxu0
    %v864 = vadd.f32 0.0, %v863
    %865 = vmatmul.f32.gmra.mxu0 %v98
    %v866 = vpop.f32.mrf.mxu0
    %v867 = vadd.f32 0.0, %v866
    %868 = vmatmul.f32.gmra.mxu0 %v100
    %v869 = vpop.f32.mrf.mxu0
    %v870 = vadd.f32 0.0, %v869
    %871 = vmatmul.f32.gmra.mxu0 %v102
    %v872 = vpop.f32.mrf.mxu0
    %v873 = vadd.f32 0.0, %v872
    %874 = vmatmul.f32.gmra.mxu0 %v104
    %v875 = vpop.f32.mrf.mxu0
    %v876 = vadd.f32 0.0, %v875
    %877 = vmatmul.f32.gmra.mxu0 %v106
    %v878 = vpop.f32.mrf.mxu0
    %v879 = vadd.f32 0.0, %v878
    %880 = vmatmul.f32.gmra.mxu0 %v108
    %v881 = vpop.f32.mrf.mxu0
    %v882 = vadd.f32 0.0, %v881
    %883 = vmatmul.f32.gmra.mxu0 %v110
    %v884 = vpop.f32.mrf.mxu0
    %v885 = vadd.f32 0.0, %v884
    %886 = vmatmul.f32.gmra.mxu0 %v112
    %v887 = vpop.f32.mrf.mxu0
    %v888 = vadd.f32 0.0, %v887
    %889 = vmatmul.f32.gmra.mxu0 %v114
    %v890 = vpop.f32.mrf.mxu0
    %v891 = vadd.f32 0.0, %v890
    %892 = vmatmul.f32.gmra.mxu0 %v116
    %v893 = vpop.f32.mrf.mxu0
    %v894 = vadd.f32 0.0, %v893
    %895 = vmatmul.f32.gmra.mxu0 %v118
    %v896 = vpop.f32.mrf.mxu0
    %v897 = vadd.f32 0.0, %v896
    %898 = vmatmul.f32.gmra.mxu0 %v120
    %v899 = vpop.f32.mrf.mxu0
    %v900 = vadd.f32 0.0, %v899
    %901 = vmatmul.f32.gmra.mxu0 %v122
    %v902 = vpop.f32.mrf.mxu0
    %v903 = vadd.f32 0.0, %v902
    %904 = vdwg.mxu0
    %905 = vmatpush.msra.mxu0 0.0
    %906 = vmatpush.msra.mxu0 0.0
    %907 = vmatpush.msra.mxu0 0.0
    %908 = vmatpush.msra.mxu0 0.0
    %909 = vmatpush.msra.mxu0 0.0
    %910 = vmatpush.msra.mxu0 0.0
    %911 = vmatpush.msra.mxu0 0.0
    %912 = vmatpush.msra.mxu0 %v348
    %913 = vmatpush.msra.mxu0 %v171
    %914 = vmatpush.msra.mxu0 %v169
    %915 = vmatpush.msra.mxu0 %v167
    %916 = vmatpush.msra.mxu0 %v165
    %917 = vmatpush.msra.mxu0 %v163
    %918 = vmatpush.msra.mxu0 %v161
    %919 = vmatpush.msra.mxu0 %v159
    %920 = vmatpush.msra.mxu0 %v157
    %921 = vmatmul.f32.gmra.mxu0 %v176
    %v922 = vpop.f32.mrf.mxu0
    %v923 = vadd.f32 %v738, %v922
    %924 = vmatmul.f32.gmra.mxu0 %v179
    %v925 = vpop.f32.mrf.mxu0
    %v926 = vadd.f32 %v741, %v925
    %927 = vmatmul.f32.gmra.mxu0 %v182
    %v928 = vpop.f32.mrf.mxu0
    %v929 = vadd.f32 %v744, %v928
    %930 = vmatmul.f32.gmra.mxu0 %v185
    %v931 = vpop.f32.mrf.mxu0
    %v932 = vadd.f32 %v747, %v931
    %933 = vmatmul.f32.gmra.mxu0 %v188
    %v934 = vpop.f32.mrf.mxu0
    %v935 = vadd.f32 %v750, %v934
    %936 = vmatmul.f32.gmra.mxu0 %v191
    %v937 = vpop.f32.mrf.mxu0
    %v938 = vadd.f32 %v753, %v937
    %939 = vmatmul.f32.gmra.mxu0 %v194
    %v940 = vpop.f32.mrf.mxu0
    %v941 = vadd.f32 %v756, %v940
    %942 = vmatmul.f32.gmra.mxu0 %v197
    %v943 = vpop.f32.mrf.mxu0
    %v944 = vadd.f32 %v759, %v943
    %945 = vmatmul.f32.gmra.mxu0 %v200
    %v946 = vpop.f32.mrf.mxu0
    %v947 = vadd.f32 %v762, %v946
    %948 = vmatmul.f32.gmra.mxu0 %v203
    %v949 = vpop.f32.mrf.mxu0
    %v950 = vadd.f32 %v765, %v949
    %951 = vmatmul.f32.gmra.mxu0 %v206
    %v952 = vpop.f32.mrf.mxu0
    %v953 = vadd.f32 %v768, %v952
    %954 = vmatmul.f32.gmra.mxu0 %v209
    %v955 = vpop.f32.mrf.mxu0
    %v956 = vadd.f32 %v771, %v955
    %957 = vmatmul.f32.gmra.mxu0 %v212
    %v958 = vpop.f32.mrf.mxu0
    %v959 = vadd.f32 %v774, %v958
    %960 = vmatmul.f32.gmra.mxu0 %v215
    %v961 = vpop.f32.mrf.mxu0
    %v962 = vadd.f32 %v777, %v961
    %963 = vmatmul.f32.gmra.mxu0 %v218
    %v964 = vpop.f32.mrf.mxu0
    %v965 = vadd.f32 %v780, %v964
    %966 = vmatmul.f32.gmra.mxu0 %v221
    %v967 = vpop.f32.mrf.mxu0
    %v968 = vadd.f32 %v783, %v967
    %969 = vmatmul.f32.gmra.mxu0 %v224
    %v970 = vpop.f32.mrf.mxu0
    %v971 = vadd.f32 %v786, %v970
    %972 = vmatmul.f32.gmra.mxu0 %v227
    %v973 = vpop.f32.mrf.mxu0
    %v974 = vadd.f32 %v789, %v973
    %975 = vmatmul.f32.gmra.mxu0 %v230
    %v976 = vpop.f32.mrf.mxu0
    %v977 = vadd.f32 %v792, %v976
    %978 = vmatmul.f32.gmra.mxu0 %v233
    %v979 = vpop.f32.mrf.mxu0
    %v980 = vadd.f32 %v795, %v979
    %981 = vmatmul.f32.gmra.mxu0 %v236
    %v982 = vpop.f32.mrf.mxu0
    %v983 = vadd.f32 %v798, %v982
    %984 = vmatmul.f32.gmra.mxu0 %v239
    %v985 = vpop.f32.mrf.mxu0
    %v986 = vadd.f32 %v801, %v985
    %987 = vmatmul.f32.gmra.mxu0 %v242
    %v988 = vpop.f32.mrf.mxu0
    %v989 = vadd.f32 %v804, %v988
    %990 = vmatmul.f32.gmra.mxu0 %v245
    %v991 = vpop.f32.mrf.mxu0
    %v992 = vadd.f32 %v807, %v991
    %993 = vmatmul.f32.gmra.mxu0 %v248
    %v994 = vpop.f32.mrf.mxu0
    %v995 = vadd.f32 %v810, %v994
    %996 = vmatmul.f32.gmra.mxu0 %v251
    %v997 = vpop.f32.mrf.mxu0
    %v998 = vadd.f32 %v813, %v997
    %999 = vmatmul.f32.gmra.mxu0 %v254
    %v1000 = vpop.f32.mrf.mxu0
    %v1001 = vadd.f32 %v816, %v1000
    %1002 = vmatmul.f32.gmra.mxu0 %v257
    %v1003 = vpop.f32.mrf.mxu0
    %v1004 = vadd.f32 %v819, %v1003
    %1005 = vmatmul.f32.gmra.mxu0 %v260
    %v1006 = vpop.f32.mrf.mxu0
    %v1007 = vadd.f32 %v822, %v1006
    %1008 = vmatmul.f32.gmra.mxu0 %v263
    %v1009 = vpop.f32.mrf.mxu0
    %v1010 = vadd.f32 %v825, %v1009
    %1011 = vmatmul.f32.gmra.mxu0 %v266
    %v1012 = vpop.f32.mrf.mxu0
    %v1013 = vadd.f32 %v828, %v1012
    %1014 = vmatmul.f32.gmra.mxu0 %v269
    %v1015 = vpop.f32.mrf.mxu0
    %v1016 = vadd.f32 %v831, %v1015
    %1017 = vmatmul.f32.gmra.mxu0 %v272
    %v1018 = vpop.f32.mrf.mxu0
    %v1019 = vadd.f32 %v834, %v1018
    %1020 = vmatmul.f32.gmra.mxu0 %v275
    %v1021 = vpop.f32.mrf.mxu0
    %v1022 = vadd.f32 %v837, %v1021
    %1023 = vmatmul.f32.gmra.mxu0 %v278
    %v1024 = vpop.f32.mrf.mxu0
    %v1025 = vadd.f32 %v840, %v1024
    %1026 = vmatmul.f32.gmra.mxu0 %v281
    %v1027 = vpop.f32.mrf.mxu0
    %v1028 = vadd.f32 %v843, %v1027
    %1029 = vmatmul.f32.gmra.mxu0 %v284
    %v1030 = vpop.f32.mrf.mxu0
    %v1031 = vadd.f32 %v846, %v1030
    %1032 = vmatmul.f32.gmra.mxu0 %v287
    %v1033 = vpop.f32.mrf.mxu0
    %v1034 = vadd.f32 %v849, %v1033
    %1035 = vmatmul.f32.gmra.mxu0 %v290
    %v1036 = vpop.f32.mrf.mxu0
    %v1037 = vadd.f32 %v852, %v1036
    %1038 = vmatmul.f32.gmra.mxu0 %v293
    %v1039 = vpop.f32.mrf.mxu0
    %v1040 = vadd.f32 %v855, %v1039
    %1041 = vmatmul.f32.gmra.mxu0 %v296
    %v1042 = vpop.f32.mrf.mxu0
    %v1043 = vadd.f32 %v858, %v1042
    %1044 = vmatmul.f32.gmra.mxu0 %v299
    %v1045 = vpop.f32.mrf.mxu0
    %v1046 = vadd.f32 %v861, %v1045
    %1047 = vmatmul.f32.gmra.mxu0 %v302
    %v1048 = vpop.f32.mrf.mxu0
    %v1049 = vadd.f32 %v864, %v1048
    %1050 = vmatmul.f32.gmra.mxu0 %v305
    %v1051 = vpop.f32.mrf.mxu0
    %v1052 = vadd.f32 %v867, %v1051
    %1053 = vmatmul.f32.gmra.mxu0 %v308
    %v1054 = vpop.f32.mrf.mxu0
    %v1055 = vadd.f32 %v870, %v1054
    %1056 = vmatmul.f32.gmra.mxu0 %v311
    %v1057 = vpop.f32.mrf.mxu0
    %v1058 = vadd.f32 %v873, %v1057
    %1059 = vmatmul.f32.gmra.mxu0 %v314
    %v1060 = vpop.f32.mrf.mxu0
    %v1061 = vadd.f32 %v876, %v1060
    %1062 = vmatmul.f32.gmra.mxu0 %v317
    %v1063 = vpop.f32.mrf.mxu0
    %v1064 = vadd.f32 %v879, %v1063
    %1065 = vmatmul.f32.gmra.mxu0 %v320
    %v1066 = vpop.f32.mrf.mxu0
    %v1067 = vadd.f32 %v882, %v1066
    %1068 = vmatmul.f32.gmra.mxu0 %v323
    %v1069 = vpop.f32.mrf.mxu0
    %v1070 = vadd.f32 %v885, %v1069
    %1071 = vmatmul.f32.gmra.mxu0 %v326
    %v1072 = vpop.f32.mrf.mxu0
    %v1073 = vadd.f32 %v888, %v1072
    %1074 = vmatmul.f32.gmra.mxu0 %v329
    %v1075 = vpop.f32.mrf.mxu0
    %v1076 = vadd.f32 %v891, %v1075
    %1077 = vmatmul.f32.gmra.mxu0 %v332
    %v1078 = vpop.f32.mrf.mxu0
    %v1079 = vadd.f32 %v894, %v1078
    %1080 = vmatmul.f32.gmra.mxu0 %v335
    %v1081 = vpop.f32.mrf.mxu0
    %v1082 = vadd.f32 %v897, %v1081
    %1083 = vmatmul.f32.gmra.mxu0 %v338
    %v1084 = vpop.f32.mrf.mxu0
    %v1085 = vadd.f32 %v900, %v1084
    %1086 = vmatmul.f32.gmra.mxu0 %v341
    %v1087 = vpop.f32.mrf.mxu0
    %v1088 = vadd.f32 %v903, %v1087
    %1089 = vdwg.mxu0
    %1090 = vst [vmem:[#allocation2] sm:$0xff] %v553
    %1091 = vst [vmem:[#allocation2 + $0x8] sm:$0xff] %v923
    %1092 = vst [vmem:[#allocation2 + $0x10] sm:$0xff] %v556
    %1093 = vst [vmem:[#allocation2 + $0x18] sm:$0xff] %v926
    %1094 = vst [vmem:[#allocation2 + $0x20] sm:$0xff] %v559
    %1095 = vst [vmem:[#allocation2 + $0x28] sm:$0xff] %v929
    %1096 = vst [vmem:[#allocation2 + $0x30] sm:$0xff] %v562
    %1097 = vst [vmem:[#allocation2 + $0x38] sm:$0xff] %v932
    %1098 = vst [vmem:[#allocation2 + $0x40] sm:$0xff] %v565
    %1099 = vst [vmem:[#allocation2 + $0x48] sm:$0xff] %v935
    %1100 = vst [vmem:[#allocation2 + $0x50] sm:$0xff] %v568
    %1101 = vst [vmem:[#allocation2 + $0x58] sm:$0xff] %v938
    %1102 = vst [vmem:[#allocation2 + $0x60] sm:$0xff] %v571
    %1103 = vst [vmem:[#allocation2 + $0x68] sm:$0xff] %v941
    %1104 = vst [vmem:[#allocation2 + $0x70] sm:$0xff] %v574
    %1105 = vst [vmem:[#allocation2 + $0x78] sm:$0xff] %v944
    %1106 = vst [vmem:[#allocation2 + $0x80] sm:$0xff] %v577
    %1107 = vst [vmem:[#allocation2 + $0x88] sm:$0xff] %v947
    %1108 = vst [vmem:[#allocation2 + $0x90] sm:$0xff] %v580
    %1109 = vst [vmem:[#allocation2 + $0x98] sm:$0xff] %v950
    %1110 = vst [vmem:[#allocation2 + $0xa0] sm:$0xff] %v583
    %1111 = vst [vmem:[#allocation2 + $0xa8] sm:$0xff] %v953
    %1112 = vst [vmem:[#allocation2 + $0xb0] sm:$0xff] %v586
    %1113 = vst [vmem:[#allocation2 + $0xb8] sm:$0xff] %v956
    %1114 = vst [vmem:[#allocation2 + $0xc0] sm:$0xff] %v589
    %1115 = vst [vmem:[#allocation2 + $0xc8] sm:$0xff] %v959
    %1116 = vst [vmem:[#allocation2 + $0xd0] sm:$0xff] %v592
    %1117 = vst [vmem:[#allocation2 + $0xd8] sm:$0xff] %v962
    %1118 = vst [vmem:[#allocation2 + $0xe0] sm:$0xff] %v595
    %1119 = vst [vmem:[#allocation2 + $0xe8] sm:$0xff] %v965
    %1120 = vst [vmem:[#allocation2 + $0xf0] sm:$0xff] %v598
    %1121 = vst [vmem:[#allocation2 + $0xf8] sm:$0xff] %v968
    %1122 = vst [vmem:[#allocation2 + $0x100] sm:$0xff] %v601
    %1123 = vst [vmem:[#allocation2 + $0x108] sm:$0xff] %v971
    %1124 = vst [vmem:[#allocation2 + $0x110] sm:$0xff] %v604
    %1125 = vst [vmem:[#allocation2 + $0x118] sm:$0xff] %v974
    %1126 = vst [vmem:[#allocation2 + $0x120] sm:$0xff] %v607
    %1127 = vst [vmem:[#allocation2 + $0x128] sm:$0xff] %v977
    %1128 = vst [vmem:[#allocation2 + $0x130] sm:$0xff] %v610
    %1129 = vst [vmem:[#allocation2 + $0x138] sm:$0xff] %v980
    %1130 = vst [vmem:[#allocation2 + $0x140] sm:$0xff] %v613
    %1131 = vst [vmem:[#allocation2 + $0x148] sm:$0xff] %v983
    %1132 = vst [vmem:[#allocation2 + $0x150] sm:$0xff] %v616
    %1133 = vst [vmem:[#allocation2 + $0x158] sm:$0xff] %v986
    %1134 = vst [vmem:[#allocation2 + $0x160] sm:$0xff] %v619
    %1135 = vst [vmem:[#allocation2 + $0x168] sm:$0xff] %v989
    %1136 = vst [vmem:[#allocation2 + $0x170] sm:$0xff] %v622
    %1137 = vst [vmem:[#allocation2 + $0x178] sm:$0xff] %v992
    %1138 = vst [vmem:[#allocation2 + $0x180] sm:$0xff] %v625
    %1139 = vst [vmem:[#allocation2 + $0x188] sm:$0xff] %v995
    %1140 = vst [vmem:[#allocation2 + $0x190] sm:$0xff] %v628
    %1141 = vst [vmem:[#allocation2 + $0x198] sm:$0xff] %v998
    %1142 = vst [vmem:[#allocation2 + $0x1a0] sm:$0xff] %v631
    %1143 = vst [vmem:[#allocation2 + $0x1a8] sm:$0xff] %v1001
    %1144 = vst [vmem:[#allocation2 + $0x1b0] sm:$0xff] %v634
    %1145 = vst [vmem:[#allocation2 + $0x1b8] sm:$0xff] %v1004
    %1146 = vst [vmem:[#allocation2 + $0x1c0] sm:$0xff] %v637
    %1147 = vst [vmem:[#allocation2 + $0x1c8] sm:$0xff] %v1007
    %1148 = vst [vmem:[#allocation2 + $0x1d0] sm:$0xff] %v640
    %1149 = vst [vmem:[#allocation2 + $0x1d8] sm:$0xff] %v1010
    %1150 = vst [vmem:[#allocation2 + $0x1e0] sm:$0xff] %v643
    %1151 = vst [vmem:[#allocation2 + $0x1e8] sm:$0xff] %v1013
    %1152 = vst [vmem:[#allocation2 + $0x1f0] sm:$0xff] %v646
    %1153 = vst [vmem:[#allocation2 + $0x1f8] sm:$0xff] %v1016
    %1154 = vst [vmem:[#allocation2 + $0x200] sm:$0xff] %v649
    %1155 = vst [vmem:[#allocation2 + $0x208] sm:$0xff] %v1019
    %1156 = vst [vmem:[#allocation2 + $0x210] sm:$0xff] %v652
    %1157 = vst [vmem:[#allocation2 + $0x218] sm:$0xff] %v1022
    %1158 = vst [vmem:[#allocation2 + $0x220] sm:$0xff] %v655
    %1159 = vst [vmem:[#allocation2 + $0x228] sm:$0xff] %v1025
    %1160 = vst [vmem:[#allocation2 + $0x230] sm:$0xff] %v658
    %1161 = vst [vmem:[#allocation2 + $0x238] sm:$0xff] %v1028
    %1162 = vst [vmem:[#allocation2 + $0x240] sm:$0xff] %v661
    %1163 = vst [vmem:[#allocation2 + $0x248] sm:$0xff] %v1031
    %1164 = vst [vmem:[#allocation2 + $0x250] sm:$0xff] %v664
    %1165 = vst [vmem:[#allocation2 + $0x258] sm:$0xff] %v1034
    %1166 = vst [vmem:[#allocation2 + $0x260] sm:$0xff] %v667
    %1167 = vst [vmem:[#allocation2 + $0x268] sm:$0xff] %v1037
    %1168 = vst [vmem:[#allocation2 + $0x270] sm:$0xff] %v670
    %1169 = vst [vmem:[#allocation2 + $0x278] sm:$0xff] %v1040
    %1170 = vst [vmem:[#allocation2 + $0x280] sm:$0xff] %v673
    %1171 = vst [vmem:[#allocation2 + $0x288] sm:$0xff] %v1043
    %1172 = vst [vmem:[#allocation2 + $0x290] sm:$0xff] %v676
    %1173 = vst [vmem:[#allocation2 + $0x298] sm:$0xff] %v1046
    %1174 = vst [vmem:[#allocation2 + $0x2a0] sm:$0xff] %v679
    %1175 = vst [vmem:[#allocation2 + $0x2a8] sm:$0xff] %v1049
    %1176 = vst [vmem:[#allocation2 + $0x2b0] sm:$0xff] %v682
    %1177 = vst [vmem:[#allocation2 + $0x2b8] sm:$0xff] %v1052
    %1178 = vst [vmem:[#allocation2 + $0x2c0] sm:$0xff] %v685
    %1179 = vst [vmem:[#allocation2 + $0x2c8] sm:$0xff] %v1055
    %1180 = vst [vmem:[#allocation2 + $0x2d0] sm:$0xff] %v688
    %1181 = vst [vmem:[#allocation2 + $0x2d8] sm:$0xff] %v1058
    %1182 = vst [vmem:[#allocation2 + $0x2e0] sm:$0xff] %v691
    %1183 = vst [vmem:[#allocation2 + $0x2e8] sm:$0xff] %v1061
    %1184 = vst [vmem:[#allocation2 + $0x2f0] sm:$0xff] %v694
    %1185 = vst [vmem:[#allocation2 + $0x2f8] sm:$0xff] %v1064
    %1186 = vst [vmem:[#allocation2 + $0x300] sm:$0xff] %v697
    %1187 = vst [vmem:[#allocation2 + $0x308] sm:$0xff] %v1067
    %1188 = vst [vmem:[#allocation2 + $0x310] sm:$0xff] %v700
    %1189 = vst [vmem:[#allocation2 + $0x318] sm:$0xff] %v1070
    %1190 = vst [vmem:[#allocation2 + $0x320] sm:$0xff] %v703
    %1191 = vst [vmem:[#allocation2 + $0x328] sm:$0xff] %v1073
    %1192 = vst [vmem:[#allocation2 + $0x330] sm:$0xff] %v706
    %1193 = vst [vmem:[#allocation2 + $0x338] sm:$0xff] %v1076
    %1194 = vst [vmem:[#allocation2 + $0x340] sm:$0xff] %v709
    %1195 = vst [vmem:[#allocation2 + $0x348] sm:$0xff] %v1079
    %1196 = vst [vmem:[#allocation2 + $0x350] sm:$0xff] %v712
    %1197 = vst [vmem:[#allocation2 + $0x358] sm:$0xff] %v1082
    %1198 = vst [vmem:[#allocation2 + $0x360] sm:$0xff] %v715
    %1199 = vst [vmem:[#allocation2 + $0x368] sm:$0xff] %v1085
    %1200 = vst [vmem:[#allocation2 + $0x370] sm:$0xff] %v718
    %1201 = vst [vmem:[#allocation2 + $0x378] sm:$0xff] %v1088
    %v1202 = vld [vmem:[#allocation2 + $0x60] sm:$0xff]
    %v1203 = vld [vmem:[#allocation2 + $0x68] sm:$0xff]
    %v1204 = vld [vmem:[#allocation2 + $0x70] sm:$0xff]
    %v1205 = vld [vmem:[#allocation2 + $0x78] sm:$0xff]
    %v1206 = vld [vmem:[#allocation2 + $0x40] sm:$0xff]
    %v1207 = vld [vmem:[#allocation2 + $0x48] sm:$0xff]
    %v1208 = vld [vmem:[#allocation2 + $0x50] sm:$0xff]
    %v1209 = vld [vmem:[#allocation2 + $0x58] sm:$0xff]
    %v1210 = vmul.f32 %v1206, %v1202
    %v1211 = vmul.f32 %v1207, %v1203
    %v1212 = vmul.f32 %v1208, %v1204
    %v1213 = vmul.f32 %v1209, %v1205
    %v1214 = vadd.f32 %v1210, %v1212
    %v1215 = vrot.slane %v1214, 4
    %v1216 = vadd.f32 %v1214, %v1215
    %v1217 = vrot.slane %v1216, 2
    %v1218 = vadd.f32 %v1216, %v1217
    %v1219 = vrot.slane %v1218, 1
    %v1220 = vadd.f32 %v1218, %v1219
    %v1221 = vadd.f32 %v1211, %v1213
    %v1222 = vrot.slane %v1221, 4
    %v1223 = vadd.f32 %v1221, %v1222
    %v1224 = vrot.slane %v1223, 2
    %v1225 = vadd.f32 %v1223, %v1224
    %v1226 = vrot.slane %v1225, 1
    %v1227 = vadd.f32 %v1225, %v1226
    %v1228 = vld [vmem:[#allocation2 + $0xc0] sm:$0xff]
    %v1229 = vld [vmem:[#allocation2 + $0xc8] sm:$0xff]
    %v1230 = vld [vmem:[#allocation2 + $0xd0] sm:$0xff]
    %v1231 = vld [vmem:[#allocation2 + $0xd8] sm:$0xff]
    %v1232 = vmul.f32 %v1228, %v1202
    %v1233 = vmul.f32 %v1229, %v1203
    %v1234 = vmul.f32 %v1230, %v1204
    %v1235 = vmul.f32 %v1231, %v1205
    %v1236 = vadd.f32 %v1232, %v1234
    %v1237 = vrot.slane %v1236, 4
    %v1238 = vadd.f32 %v1236, %v1237
    %v1239 = vrot.slane %v1238, 2
    %v1240 = vadd.f32 %v1238, %v1239
    %v1241 = vrot.slane %v1240, 1
    %v1242 = vadd.f32 %v1240, %v1241
    %v1243 = vadd.f32 %v1233, %v1235
    %v1244 = vrot.slane %v1243, 4
    %v1245 = vadd.f32 %v1243, %v1244
    %v1246 = vrot.slane %v1245, 2
    %v1247 = vadd.f32 %v1245, %v1246
    %v1248 = vrot.slane %v1247, 1
    %v1249 = vadd.f32 %v1247, %v1248
    %v1250 = vld [vmem:[#allocation2 + $0x140] sm:$0xff]
    %v1251 = vld [vmem:[#allocation2 + $0x148] sm:$0xff]
    %v1252 = vld [vmem:[#allocation2 + $0x150] sm:$0xff]
    %v1253 = vld [vmem:[#allocation2 + $0x158] sm:$0xff]
    %v1254 = vmul.f32 %v1250, %v1202
    %v1255 = vmul.f32 %v1251, %v1203
    %v1256 = vmul.f32 %v1252, %v1204
    %v1257 = vmul.f32 %v1253, %v1205
    %v1258 = vadd.f32 %v1254, %v1256
    %v1259 = vrot.slane %v1258, 4
    %v1260 = vadd.f32 %v1258, %v1259
    %v1261 = vrot.slane %v1260, 2
    %v1262 = vadd.f32 %v1260, %v1261
    %v1263 = vrot.slane %v1262, 1
    %v1264 = vadd.f32 %v1262, %v1263
    %v1265 = vadd.f32 %v1255, %v1257
    %v1266 = vrot.slane %v1265, 4
    %v1267 = vadd.f32 %v1265, %v1266
    %v1268 = vrot.slane %v1267, 2
    %v1269 = vadd.f32 %v1267, %v1268
    %v1270 = vrot.slane %v1269, 1
    %v1271 = vadd.f32 %v1269, %v1270
    %v1272 = vld [vmem:[#allocation2 + $0x1c0] sm:$0xff]
    %v1273 = vld [vmem:[#allocation2 + $0x1c8] sm:$0xff]
    %v1274 = vld [vmem:[#allocation2 + $0x1d0] sm:$0xff]
    %v1275 = vld [vmem:[#allocation2 + $0x1d8] sm:$0xff]
    %v1276 = vmul.f32 %v1272, %v1202
    %v1277 = vmul.f32 %v1273, %v1203
    %v1278 = vmul.f32 %v1274, %v1204
    %v1279 = vmul.f32 %v1275, %v1205
    %v1280 = vadd.f32 %v1276, %v1278
    %v1281 = vrot.slane %v1280, 4
    %v1282 = vadd.f32 %v1280, %v1281
    %v1283 = vrot.slane %v1282, 2
    %v1284 = vadd.f32 %v1282, %v1283
    %v1285 = vrot.slane %v1284, 1
    %v1286 = vadd.f32 %v1284, %v1285
    %v1287 = vadd.f32 %v1277, %v1279
    %v1288 = vrot.slane %v1287, 4
    %v1289 = vadd.f32 %v1287, %v1288
    %v1290 = vrot.slane %v1289, 2
    %v1291 = vadd.f32 %v1289, %v1290
    %v1292 = vrot.slane %v1291, 1
    %v1293 = vadd.f32 %v1291, %v1292
    %v1294 = vld [vmem:[#allocation2 + $0x240] sm:$0xff]
    %v1295 = vld [vmem:[#allocation2 + $0x248] sm:$0xff]
    %v1296 = vld [vmem:[#allocation2 + $0x250] sm:$0xff]
    %v1297 = vld [vmem:[#allocation2 + $0x258] sm:$0xff]
    %v1298 = vmul.f32 %v1294, %v1202
    %v1299 = vmul.f32 %v1295, %v1203
    %v1300 = vmul.f32 %v1296, %v1204
    %v1301 = vmul.f32 %v1297, %v1205
    %v1302 = vadd.f32 %v1298, %v1300
    %v1303 = vrot.slane %v1302, 4
    %v1304 = vadd.f32 %v1302, %v1303
    %v1305 = vrot.slane %v1304, 2
    %v1306 = vadd.f32 %v1304, %v1305
    %v1307 = vrot.slane %v1306, 1
    %v1308 = vadd.f32 %v1306, %v1307
    %v1309 = vadd.f32 %v1299, %v1301
    %v1310 = vrot.slane %v1309, 4
    %v1311 = vadd.f32 %v1309, %v1310
    %v1312 = vrot.slane %v1311, 2
    %v1313 = vadd.f32 %v1311, %v1312
    %v1314 = vrot.slane %v1313, 1
    %v1315 = vadd.f32 %v1313, %v1314
    %v1316 = vld [vmem:[#allocation2 + $0x2c0] sm:$0xff]
    %v1317 = vld [vmem:[#allocation2 + $0x2c8] sm:$0xff]
    %v1318 = vld [vmem:[#allocation2 + $0x2d0] sm:$0xff]
    %v1319 = vld [vmem:[#allocation2 + $0x2d8] sm:$0xff]
    %v1320 = vmul.f32 %v1316, %v1202
    %v1321 = vmul.f32 %v1317, %v1203
    %v1322 = vmul.f32 %v1318, %v1204
    %v1323 = vmul.f32 %v1319, %v1205
    %v1324 = vadd.f32 %v1320, %v1322
    %v1325 = vrot.slane %v1324, 4
    %v1326 = vadd.f32 %v1324, %v1325
    %v1327 = vrot.slane %v1326, 2
    %v1328 = vadd.f32 %v1326, %v1327
    %v1329 = vrot.slane %v1328, 1
    %v1330 = vadd.f32 %v1328, %v1329
    %v1331 = vadd.f32 %v1321, %v1323
    %v1332 = vrot.slane %v1331, 4
    %v1333 = vadd.f32 %v1331, %v1332
    %v1334 = vrot.slane %v1333, 2
    %v1335 = vadd.f32 %v1333, %v1334
    %v1336 = vrot.slane %v1335, 1
    %v1337 = vadd.f32 %v1335, %v1336
    %v1338 = vld [vmem:[#allocation2 + $0x340] sm:$0xff]
    %v1339 = vld [vmem:[#allocation2 + $0x348] sm:$0xff]
    %v1340 = vld [vmem:[#allocation2 + $0x350] sm:$0xff]
    %v1341 = vld [vmem:[#allocation2 + $0x358] sm:$0xff]
    %v1342 = vmul.f32 %v1338, %v1202
    %v1343 = vmul.f32 %v1339, %v1203
    %v1344 = vmul.f32 %v1340, %v1204
    %v1345 = vmul.f32 %v1341, %v1205
    %v1346 = vadd.f32 %v1342, %v1344
    %v1347 = vrot.slane %v1346, 4
    %v1348 = vadd.f32 %v1346, %v1347
    %v1349 = vrot.slane %v1348, 2
    %v1350 = vadd.f32 %v1348, %v1349
    %v1351 = vrot.slane %v1350, 1
    %v1352 = vadd.f32 %v1350, %v1351
    %v1353 = vadd.f32 %v1343, %v1345
    %v1354 = vrot.slane %v1353, 4
    %v1355 = vadd.f32 %v1353, %v1354
    %v1356 = vrot.slane %v1355, 2
    %v1357 = vadd.f32 %v1355, %v1356
    %v1358 = vrot.slane %v1357, 1
    %v1359 = vadd.f32 %v1357, %v1358
    %v1360 = vmax.f32 %v1220, %v1242
    %v1361 = vmax.f32 %v1227, %v1249
    %v1362 = vmax.f32 %v1360, %v1264
    %v1363 = vmax.f32 %v1361, %v1271
    %v1364 = vmax.f32 %v1362, %v1286
    %v1365 = vmax.f32 %v1363, %v1293
    %v1366 = vmax.f32 %v1364, %v1308
    %v1367 = vmax.f32 %v1365, %v1315
    %v1368 = vmax.f32 %v1366, %v1330
    %v1369 = vmax.f32 %v1367, %v1337
    %v1370 = vmax.f32 %v1368, %v1352
    %v1371 = vmax.f32 %v1369, %v1359
    %v1372 = vsub.f32 %v1220, %v1370
    %v1373 = vsub.f32 %v1227, %v1371
    %v1374 = vmul.f32 %v1372, 1.442695
    %v1375 = vpow.pop %v1374
    %v1376 = vmul.f32 %v1373, 1.442695
    %v1377 = vpow.pop %v1376
    %v1378 = vsub.f32 %v1242, %v1370
    %v1379 = vsub.f32 %v1249, %v1371
    %v1380 = vmul.f32 %v1378, 1.442695
    %v1381 = vpow.pop %v1380
    %v1382 = vmul.f32 %v1379, 1.442695
    %v1383 = vpow.pop %v1382
    %v1384 = vsub.f32 %v1264, %v1370
    %v1385 = vsub.f32 %v1271, %v1371
    %v1386 = vmul.f32 %v1384, 1.442695
    %v1387 = vpow.pop %v1386
    %v1388 = vmul.f32 %v1385, 1.442695
    %v1389 = vpow.pop %v1388
    %v1390 = vsub.f32 %v1286, %v1370
    %v1391 = vsub.f32 %v1293, %v1371
    %v1392 = vmul.f32 %v1390, 1.442695
    %v1393 = vpow.pop %v1392
    %v1394 = vmul.f32 %v1391, 1.442695
    %v1395 = vpow.pop %v1394
    %v1396 = vsub.f32 %v1308, %v1370
    %v1397 = vsub.f32 %v1315, %v1371
    %v1398 = vmul.f32 %v1396, 1.442695
    %v1399 = vpow.pop %v1398
    %v1400 = vmul.f32 %v1397, 1.442695
    %v1401 = vpow.pop %v1400
    %v1402 = vsub.f32 %v1330, %v1370
    %v1403 = vsub.f32 %v1337, %v1371
    %v1404 = vmul.f32 %v1402, 1.442695
    %v1405 = vpow.pop %v1404
    %v1406 = vmul.f32 %v1403, 1.442695
    %v1407 = vpow.pop %v1406
    %v1408 = vsub.f32 %v1352, %v1370
    %v1409 = vsub.f32 %v1359, %v1371
    %v1410 = vmul.f32 %v1408, 1.442695
    %v1411 = vpow.pop %v1410
    %v1412 = vmul.f32 %v1409, 1.442695
    %v1413 = vpow.pop %v1412
    %v1414 = vadd.f32 %v1375, %v1381
    %v1415 = vadd.f32 %v1377, %v1383
    %v1416 = vadd.f32 %v1414, %v1387
    %v1417 = vadd.f32 %v1415, %v1389
    %v1418 = vadd.f32 %v1416, %v1393
    %v1419 = vadd.f32 %v1417, %v1395
    %v1420 = vadd.f32 %v1418, %v1399
    %v1421 = vadd.f32 %v1419, %v1401
    %v1422 = vadd.f32 %v1420, %v1405
    %v1423 = vadd.f32 %v1421, %v1407
    %v1424 = vadd.f32 %v1422, %v1411
    %v1425 = vadd.f32 %v1423, %v1413
    %v1426 = vrcp.pop %v1424
    %v1427 = vrcp.pop %v1425
    %v1428 = vmul.f32 %v1424, %v1426
    %v1429 = vmul.f32 %v1425, %v1427
    %v1430 = vsub.f32 2.0, %v1428
    %v1431 = vsub.f32 2.0, %v1429
    %v1432 = vmul.f32 %v1426, %v1430
    %v1433 = vmul.f32 %v1427, %v1431
    %v1434 = vmul.f32 %v1424, %v1432
    %v1435 = vmul.f32 %v1425, %v1433
    %v1436 = vsub.f32 2.0, %v1434
    %v1437 = vsub.f32 2.0, %v1435
    %v1438 = vmul.f32 %v1432, %v1436
    %v1439 = vmul.f32 %v1433, %v1437
    %v1440 = vld [vmem:[#allocation2] sm:$0xff]
    %v1441 = vld [vmem:[#allocation2 + $0x8] sm:$0xff]
    %v1442 = vld [vmem:[#allocation2 + $0x10] sm:$0xff]
    %v1443 = vld [vmem:[#allocation2 + $0x18] sm:$0xff]
    %v1444 = vld [vmem:[#allocation2 + $0x20] sm:$0xff]
    %v1445 = vld [vmem:[#allocation2 + $0x28] sm:$0xff]
    %v1446 = vld [vmem:[#allocation2 + $0x30] sm:$0xff]
    %v1447 = vld [vmem:[#allocation2 + $0x38] sm:$0xff]
    %v1448 = vmul.f32 %v1375, %v1440
    %v1449 = vmul.f32 %v1377, %v1441
    %v1450 = vmul.f32 %v1375, %v1442
    %v1451 = vmul.f32 %v1377, %v1443
    %v1452 = vmul.f32 %v1375, %v1444
    %v1453 = vmul.f32 %v1377, %v1445
    %v1454 = vmul.f32 %v1375, %v1446
    %v1455 = vmul.f32 %v1377, %v1447
    %v1456 = vld [vmem:[#allocation2 + $0x80] sm:$0xff]
    %v1457 = vld [vmem:[#allocation2 + $0x88] sm:$0xff]
    %v1458 = vld [vmem:[#allocation2 + $0x90] sm:$0xff]
    %v1459 = vld [vmem:[#allocation2 + $0x98] sm:$0xff]
    %v1460 = vld [vmem:[#allocation2 + $0xa0] sm:$0xff]
    %v1461 = vld [vmem:[#allocation2 + $0xa8] sm:$0xff]
    %v1462 = vld [vmem:[#allocation2 + $0xb0] sm:$0xff]
    %v1463 = vld [vmem:[#allocation2 + $0xb8] sm:$0xff]
    %v1464 = vmul.f32 %v1381, %v1456
    %v1465 = vmul.f32 %v1383, %v1457
    %v1466 = vmul.f32 %v1381, %v1458
    %v1467 = vmul.f32 %v1383, %v1459
    %v1468 = vmul.f32 %v1381, %v1460
    %v1469 = vmul.f32 %v1383, %v1461
    %v1470 = vmul.f32 %v1381, %v1462
    %v1471 = vmul.f32 %v1383, %v1463
    %v1472 = vadd.f32 %v1448, %v1464
    %v1473 = vadd.f32 %v1449, %v1465
    %v1474 = vadd.f32 %v1450, %v1466
    %v1475 = vadd.f32 %v1451, %v1467
    %v1476 = vadd.f32 %v1452, %v1468
    %v1477 = vadd.f32 %v1453, %v1469
    %v1478 = vadd.f32 %v1454, %v1470
    %v1479 = vadd.f32 %v1455, %v1471
    %v1480 = vld [vmem:[#allocation2 + $0x100] sm:$0xff]
    %v1481 = vld [vmem:[#allocation2 + $0x108] sm:$0xff]
    %v1482 = vld [vmem:[#allocation2 + $0x110] sm:$0xff]
    %v1483 = vld [vmem:[#allocation2 + $0x118] sm:$0xff]
    %v1484 = vld [vmem:[#allocation2 + $0x120] sm:$0xff]
    %v1485 = vld [vmem:[#allocation2 + $0x128] sm:$0xff]
    %v1486 = vld [vmem:[#allocation2 + $0x130] sm:$0xff]
    %v1487 = vld [vmem:[#allocation2 + $0x138] sm:$0xff]
    %v1488 = vmul.f32 %v1387, %v1480
    %v1489 = vmul.f32 %v1389, %v1481
    %v1490 = vmul.f32 %v1387, %v1482
    %v1491 = vmul.f32 %v1389, %v1483
    %v1492 = vmul.f32 %v1387, %v1484
    %v1493 = vmul.f32 %v1389, %v1485
    %v1494 = vmul.f32 %v1387, %v1486
    %v1495 = vmul.f32 %v1389, %v1487
    %v1496 = vadd.f32 %v1472, %v1488
    %v1497 = vadd.f32 %v1473, %v1489
    %v1498 = vadd.f32 %v1474, %v1490
    %v1499 = vadd.f32 %v1475, %v1491
    %v1500 = vadd.f32 %v1476, %v1492
    %v1501 = vadd.f32 %v1477, %v1493
    %v1502 = vadd.f32 %v1478, %v1494
    %v1503 = vadd.f32 %v1479, %v1495
    %v1504 = vld [vmem:[#allocation2 + $0x180] sm:$0xff]
    %v1505 = vld [vmem:[#allocation2 + $0x188] sm:$0xff]
    %v1506 = vld [vmem:[#allocation2 + $0x190] sm:$0xff]
    %v1507 = vld [vmem:[#allocation2 + $0x198] sm:$0xff]
    %v1508 = vld [vmem:[#allocation2 + $0x1a0] sm:$0xff]
    %v1509 = vld [vmem:[#allocation2 + $0x1a8] sm:$0xff]
    %v1510 = vld [vmem:[#allocation2 + $0x1b0] sm:$0xff]
    %v1511 = vld [vmem:[#allocation2 + $0x1b8] sm:$0xff]
    %v1512 = vmul.f32 %v1393, %v1504
    %v1513 = vmul.f32 %v1395, %v1505
    %v1514 = vmul.f32 %v1393, %v1506
    %v1515 = vmul.f32 %v1395, %v1507
    %v1516 = vmul.f32 %v1393, %v1508
    %v1517 = vmul.f32 %v1395, %v1509
    %v1518 = vmul.f32 %v1393, %v1510
    %v1519 = vmul.f32 %v1395, %v1511
    %v1520 = vadd.f32 %v1496, %v1512
    %v1521 = vadd.f32 %v1497, %v1513
    %v1522 = vadd.f32 %v1498, %v1514
    %v1523 = vadd.f32 %v1499, %v1515
    %v1524 = vadd.f32 %v1500, %v1516
    %v1525 = vadd.f32 %v1501, %v1517
    %v1526 = vadd.f32 %v1502, %v1518
    %v1527 = vadd.f32 %v1503, %v1519
    %v1528 = vld [vmem:[#allocation2 + $0x200] sm:$0xff]
    %v1529 = vld [vmem:[#allocation2 + $0x208] sm:$0xff]
    %v1530 = vld [vmem:[#allocation2 + $0x210] sm:$0xff]
    %v1531 = vld [vmem:[#allocation2 + $0x218] sm:$0xff]
    %v1532 = vld [vmem:[#allocation2 + $0x220] sm:$0xff]
    %v1533 = vld [vmem:[#allocation2 + $0x228] sm:$0xff]
    %v1534 = vld [vmem:[#allocation2 + $0x230] sm:$0xff]
    %v1535 = vld [vmem:[#allocation2 + $0x238] sm:$0xff]
    %v1536 = vmul.f32 %v1399, %v1528
    %v1537 = vmul.f32 %v1401, %v1529
    %v1538 = vmul.f32 %v1399, %v1530
    %v1539 = vmul.f32 %v1401, %v1531
    %v1540 = vmul.f32 %v1399, %v1532
    %v1541 = vmul.f32 %v1401, %v1533
    %v1542 = vmul.f32 %v1399, %v1534
    %v1543 = vmul.f32 %v1401, %v1535
    %v1544 = vadd.f32 %v1520, %v1536
    %v1545 = vadd.f32 %v1521, %v1537
    %v1546 = vadd.f32 %v1522, %v1538
    %v1547 = vadd.f32 %v1523, %v1539
    %v1548 = vadd.f32 %v1524, %v1540
    %v1549 = vadd.f32 %v1525, %v1541
    %v1550 = vadd.f32 %v1526, %v1542
    %v1551 = vadd.f32 %v1527, %v1543
    %v1552 = vld [vmem:[#allocation2 + $0x280] sm:$0xff]
    %v1553 = vld [vmem:[#allocation2 + $0x288] sm:$0xff]
    %v1554 = vld [vmem:[#allocation2 + $0x290] sm:$0xff]
    %v1555 = vld [vmem:[#allocation2 + $0x298] sm:$0xff]
    %v1556 = vld [vmem:[#allocation2 + $0x2a0] sm:$0xff]
    %v1557 = vld [vmem:[#allocation2 + $0x2a8] sm:$0xff]
    %v1558 = vld [vmem:[#allocation2 + $0x2b0] sm:$0xff]
    %v1559 = vld [vmem:[#allocation2 + $0x2b8] sm:$0xff]
    %v1560 = vmul.f32 %v1405, %v1552
    %v1561 = vmul.f32 %v1407, %v1553
    %v1562 = vmul.f32 %v1405, %v1554
    %v1563 = vmul.f32 %v1407, %v1555
    %v1564 = vmul.f32 %v1405, %v1556
    %v1565 = vmul.f32 %v1407, %v1557
    %v1566 = vmul.f32 %v1405, %v1558
    %v1567 = vmul.f32 %v1407, %v1559
    %v1568 = vadd.f32 %v1544, %v1560
    %v1569 = vadd.f32 %v1545, %v1561
    %v1570 = vadd.f32 %v1546, %v1562
    %v1571 = vadd.f32 %v1547, %v1563
    %v1572 = vadd.f32 %v1548, %v1564
    %v1573 = vadd.f32 %v1549, %v1565
    %v1574 = vadd.f32 %v1550, %v1566
    %v1575 = vadd.f32 %v1551, %v1567
    %v1576 = vld [vmem:[#allocation2 + $0x300] sm:$0xff]
    %v1577 = vld [vmem:[#allocation2 + $0x308] sm:$0xff]
    %v1578 = vld [vmem:[#allocation2 + $0x310] sm:$0xff]
    %v1579 = vld [vmem:[#allocation2 + $0x318] sm:$0xff]
    %v1580 = vld [vmem:[#allocation2 + $0x320] sm:$0xff]
    %v1581 = vld [vmem:[#allocation2 + $0x328] sm:$0xff]
    %v1582 = vld [vmem:[#allocation2 + $0x330] sm:$0xff]
    %v1583 = vld [vmem:[#allocation2 + $0x338] sm:$0xff]
    %v1584 = vmul.f32 %v1411, %v1576
    %v1585 = vmul.f32 %v1413, %v1577
    %v1586 = vmul.f32 %v1411, %v1578
    %v1587 = vmul.f32 %v1413, %v1579
    %v1588 = vmul.f32 %v1411, %v1580
    %v1589 = vmul.f32 %v1413, %v1581
    %v1590 = vmul.f32 %v1411, %v1582
    %v1591 = vmul.f32 %v1413, %v1583
    %v1592 = vadd.f32 %v1568, %v1584
    %v1593 = vadd.f32 %v1569, %v1585
    %v1594 = vadd.f32 %v1570, %v1586
    %v1595 = vadd.f32 %v1571, %v1587
    %v1596 = vadd.f32 %v1572, %v1588
    %v1597 = vadd.f32 %v1573, %v1589
    %v1598 = vadd.f32 %v1574, %v1590
    %v1599 = vadd.f32 %v1575, %v1591
    %v1600 = vmul.f32 %v1592, %v1438
    %v1601 = vmul.f32 %v1593, %v1439
    %v1602 = vmul.f32 %v1594, %v1438
    %v1603 = vmul.f32 %v1595, %v1439
    %v1604 = vmul.f32 %v1596, %v1438
    %v1605 = vmul.f32 %v1597, %v1439
    %v1606 = vmul.f32 %v1598, %v1438
    %v1607 = vmul.f32 %v1599, %v1439
    %1608 = vst [vmem:[#allocation3] sm:$0xff] %v1600
    %1609 = vst [vmem:[#allocation3 + $0x8] sm:$0xff] %v1601
    %1610 = vst [vmem:[#allocation3 + $0x10] sm:$0xff] %v1602
    %1611 = vst [vmem:[#allocation3 + $0x18] sm:$0xff] %v1603
    %1612 = vst [vmem:[#allocation3 + $0x20] sm:$0xff] %v1604
    %1613 = vst [vmem:[#allocation3 + $0x28] sm:$0xff] %v1605
    %1614 = vst [vmem:[#allocation3 + $0x30] sm:$0xff] %v1606
    %1615 = vst [vmem:[#allocation3 + $0x38] sm:$0xff] %v1607
    %v1616 = vld [vmem:[#allocation2 + $0xe0] sm:$0xff]
    %v1617 = vld [vmem:[#allocation2 + $0xe8] sm:$0xff]
    %v1618 = vld [vmem:[#allocation2 + $0xf0] sm:$0xff]
    %v1619 = vld [vmem:[#allocation2 + $0xf8] sm:$0xff]
    %v1620 = vld [vmem:[#allocation2 + $0x40] sm:$0xff]
    %v1621 = vld [vmem:[#allocation2 + $0x48] sm:$0xff]
    %v1622 = vld [vmem:[#allocation2 + $0x50] sm:$0xff]
    %v1623 = vld [vmem:[#allocation2 + $0x58] sm:$0xff]
    %v1624 = vmul.f32 %v1620, %v1616
    %v1625 = vmul.f32 %v1621, %v1617
    %v1626 = vmul.f32 %v1622, %v1618
    %v1627 = vmul.f32 %v1623, %v1619
    %v1628 = vadd.f32 %v1624, %v1626
    %v1629 = vrot.slane %v1628, 4
    %v1630 = vadd.f32 %v1628, %v1629
    %v1631 = vrot.slane %v1630, 2
    %v1632 = vadd.f32 %v1630, %v1631
    %v1633 = vrot.slane %v1632, 1
    %v1634 = vadd.f32 %v1632, %v1633
    %v1635 = vadd.f32 %v1625, %v1627
    %v1636 = vrot.slane %v1635, 4
    %v1637 = vadd.f32 %v1635, %v1636
    %v1638 = vrot.slane %v1637, 2
    %v1639 = vadd.f32 %v1637, %v1638
    %v1640 = vrot.slane %v1639, 1
    %v1641 = vadd.f32 %v1639, %v1640
    %v1642 = vld [vmem:[#allocation2 + $0xc0] sm:$0xff]
    %v1643 = vld [vmem:[#allocation2 + $0xc8] sm:$0xff]
    %v1644 = vld [vmem:[#allocation2 + $0xd0] sm:$0xff]
    %v1645 = vld [vmem:[#allocation2 + $0xd8] sm:$0xff]
    %v1646 = vmul.f32 %v1642, %v1616
    %v1647 = vmul.f32 %v1643, %v1617
    %v1648 = vmul.f32 %v1644, %v1618
    %v1649 = vmul.f32 %v1645, %v1619
    %v1650 = vadd.f32 %v1646, %v1648
    %v1651 = vrot.slane %v1650, 4
    %v1652 = vadd.f32 %v1650, %v1651
    %v1653 = vrot.slane %v1652, 2
    %v1654 = vadd.f32 %v1652, %v1653
    %v1655 = vrot.slane %v1654, 1
    %v1656 = vadd.f32 %v1654, %v1655
    %v1657 = vadd.f32 %v1647, %v1649
    %v1658 = vrot.slane %v1657, 4
    %v1659 = vadd.f32 %v1657, %v1658
    %v1660 = vrot.slane %v1659, 2
    %v1661 = vadd.f32 %v1659, %v1660
    %v1662 = vrot.slane %v1661, 1
    %v1663 = vadd.f32 %v1661, %v1662
    %v1664 = vld [vmem:[#allocation2 + $0x140] sm:$0xff]
    %v1665 = vld [vmem:[#allocation2 + $0x148] sm:$0xff]
    %v1666 = vld [vmem:[#allocation2 + $0x150] sm:$0xff]
    %v1667 = vld [vmem:[#allocation2 + $0x158] sm:$0xff]
    %v1668 = vmul.f32 %v1664, %v1616
    %v1669 = vmul.f32 %v1665, %v1617
    %v1670 = vmul.f32 %v1666, %v1618
    %v1671 = vmul.f32 %v1667, %v1619
    %v1672 = vadd.f32 %v1668, %v1670
    %v1673 = vrot.slane %v1672, 4
    %v1674 = vadd.f32 %v1672, %v1673
    %v1675 = vrot.slane %v1674, 2
    %v1676 = vadd.f32 %v1674, %v1675
    %v1677 = vrot.slane %v1676, 1
    %v1678 = vadd.f32 %v1676, %v1677
    %v1679 = vadd.f32 %v1669, %v1671
    %v1680 = vrot.slane %v1679, 4
    %v1681 = vadd.f32 %v1679, %v1680
    %v1682 = vrot.slane %v1681, 2
    %v1683 = vadd.f32 %v1681, %v1682
    %v1684 = vrot.slane %v1683, 1
    %v1685 = vadd.f32 %v1683, %v1684
    %v1686 = vld [vmem:[#allocation2 + $0x1c0] sm:$0xff]
    %v1687 = vld [vmem:[#allocation2 + $0x1c8] sm:$0xff]
    %v1688 = vld [vmem:[#allocation2 + $0x1d0] sm:$0xff]
    %v1689 = vld [vmem:[#allocation2 + $0x1d8] sm:$0xff]
    %v1690 = vmul.f32 %v1686, %v1616
    %v1691 = vmul.f32 %v1687, %v1617
    %v1692 = vmul.f32 %v1688, %v1618
    %v1693 = vmul.f32 %v1689, %v1619
    %v1694 = vadd.f32 %v1690, %v1692
    %v1695 = vrot.slane %v1694, 4
    %v1696 = vadd.f32 %v1694, %v1695
    %v1697 = vrot.slane %v1696, 2
    %v1698 = vadd.f32 %v1696, %v1697
    %v1699 = vrot.slane %v1698, 1
    %v1700 = vadd.f32 %v1698, %v1699
    %v1701 = vadd.f32 %v1691, %v1693
    %v1702 = vrot.slane %v1701, 4
    %v1703 = vadd.f32 %v1701, %v1702
    %v1704 = vrot.slane %v1703, 2
    %v1705 = vadd.f32 %v1703, %v1704
    %v1706 = vrot.slane %v1705, 1
    %v1707 = vadd.f32 %v1705, %v1706
    %v1708 = vld [vmem:[#allocation2 + $0x240] sm:$0xff]
    %v1709 = vld [vmem:[#allocation2 + $0x248] sm:$0xff]
    %v1710 = vld [vmem:[#allocation2 + $0x250] sm:$0xff]
    %v1711 = vld [vmem:[#allocation2 + $0x258] sm:$0xff]
    %v1712 = vmul.f32 %v1708, %v1616
    %v1713 = vmul.f32 %v1709, %v1617
    %v1714 = vmul.f32 %v1710, %v1618
    %v1715 = vmul.f32 %v1711, %v1619
    %v1716 = vadd.f32 %v1712, %v1714
    %v1717 = vrot.slane %v1716, 4
    %v1718 = vadd.f32 %v1716, %v1717
    %v1719 = vrot.slane %v1718, 2
    %v1720 = vadd.f32 %v1718, %v1719
    %v1721 = vrot.slane %v1720, 1
    %v1722 = vadd.f32 %v1720, %v1721
    %v1723 = vadd.f32 %v1713, %v1715
    %v1724 = vrot.slane %v1723, 4
    %v1725 = vadd.f32 %v1723, %v1724
    %v1726 = vrot.slane %v1725, 2
    %v1727 = vadd.f32 %v1725, %v1726
    %v1728 = vrot.slane %v1727, 1
    %v1729 = vadd.f32 %v1727, %v1728
    %v1730 = vld [vmem:[#allocation2 + $0x2c0] sm:$0xff]
    %v1731 = vld [vmem:[#allocation2 + $0x2c8] sm:$0xff]
    %v1732 = vld [vmem:[#allocation2 + $0x2d0] sm:$0xff]
    %v1733 = vld [vmem:[#allocation2 + $0x2d8] sm:$0xff]
    %v1734 = vmul.f32 %v1730, %v1616
    %v1735 = vmul.f32 %v1731, %v1617
    %v1736 = vmul.f32 %v1732, %v1618
    %v1737 = vmul.f32 %v1733, %v1619
    %v1738 = vadd.f32 %v1734, %v1736
    %v1739 = vrot.slane %v1738, 4
    %v1740 = vadd.f32 %v1738, %v1739
    %v1741 = vrot.slane %v1740, 2
    %v1742 = vadd.f32 %v1740, %v1741
    %v1743 = vrot.slane %v1742, 1
    %v1744 = vadd.f32 %v1742, %v1743
    %v1745 = vadd.f32 %v1735, %v1737
    %v1746 = vrot.slane %v1745, 4
    %v1747 = vadd.f32 %v1745, %v1746
    %v1748 = vrot.slane %v1747, 2
    %v1749 = vadd.f32 %v1747, %v1748
    %v1750 = vrot.slane %v1749, 1
    %v1751 = vadd.f32 %v1749, %v1750
    %v1752 = vld [vmem:[#allocation2 + $0x340] sm:$0xff]
    %v1753 = vld [vmem:[#allocation2 + $0x348] sm:$0xff]
    %v1754 = vld [vmem:[#allocation2 + $0x350] sm:$0xff]
    %v1755 = vld [vmem:[#allocation2 + $0x358] sm:$0xff]
    %v1756 = vmul.f32 %v1752, %v1616
    %v1757 = vmul.f32 %v1753, %v1617
    %v1758 = vmul.f32 %v1754, %v1618
    %v1759 = vmul.f32 %v1755, %v1619
    %v1760 = vadd.f32 %v1756, %v1758
    %v1761 = vrot.slane %v1760, 4
    %v1762 = vadd.f32 %v1760, %v1761
    %v1763 = vrot.slane %v1762, 2
    %v1764 = vadd.f32 %v1762, %v1763
    %v1765 = vrot.slane %v1764, 1
    %v1766 = vadd.f32 %v1764, %v1765
    %v1767 = vadd.f32 %v1757, %v1759
    %v1768 = vrot.slane %v1767, 4
    %v1769 = vadd.f32 %v1767, %v1768
    %v1770 = vrot.slane %v1769, 2
    %v1771 = vadd.f32 %v1769, %v1770
    %v1772 = vrot.slane %v1771, 1
    %v1773 = vadd.f32 %v1771, %v1772
    %v1774 = vmax.f32 %v1634, %v1656
    %v1775 = vmax.f32 %v1641, %v1663
    %v1776 = vmax.f32 %v1774, %v1678
    %v1777 = vmax.f32 %v1775, %v1685
    %v1778 = vmax.f32 %v1776, %v1700
    %v1779 = vmax.f32 %v1777, %v1707
    %v1780 = vmax.f32 %v1778, %v1722
    %v1781 = vmax.f32 %v1779, %v1729
    %v1782 = vmax.f32 %v1780, %v1744
    %v1783 = vmax.f32 %v1781, %v1751
    %v1784 = vmax.f32 %v1782, %v1766
    %v1785 = vmax.f32 %v1783, %v1773
    %v1786 = vsub.f32 %v1634, %v1784
    %v1787 = vsub.f32 %v1641, %v1785
    %v1788 = vmul.f32 %v1786, 1.442695
    %v1789 = vpow.pop %v1788
    %v1790 = vmul.f32 %v1787, 1.442695
    %v1791 = vpow.pop %v1790
    %v1792 = vsub.f32 %v1656, %v1784
    %v1793 = vsub.f32 %v1663, %v1785
    %v1794 = vmul.f32 %v1792, 1.442695
    %v1795 = vpow.pop %v1794
    %v1796 = vmul.f32 %v1793, 1.442695
    %v1797 = vpow.pop %v1796
    %v1798 = vsub.f32 %v1678, %v1784
    %v1799 = vsub.f32 %v1685, %v1785
    %v1800 = vmul.f32 %v1798, 1.442695
    %v1801 = vpow.pop %v1800
    %v1802 = vmul.f32 %v1799, 1.442695
    %v1803 = vpow.pop %v1802
    %v1804 = vsub.f32 %v1700, %v1784
    %v1805 = vsub.f32 %v1707, %v1785
    %v1806 = vmul.f32 %v1804, 1.442695
    %v1807 = vpow.pop %v1806
    %v1808 = vmul.f32 %v1805, 1.442695
    %v1809 = vpow.pop %v1808
    %v1810 = vsub.f32 %v1722, %v1784
    %v1811 = vsub.f32 %v1729, %v1785
    %v1812 = vmul.f32 %v1810, 1.442695
    %v1813 = vpow.pop %v1812
    %v1814 = vmul.f32 %v1811, 1.442695
    %v1815 = vpow.pop %v1814
    %v1816 = vsub.f32 %v1744, %v1784
    %v1817 = vsub.f32 %v1751, %v1785
    %v1818 = vmul.f32 %v1816, 1.442695
    %v1819 = vpow.pop %v1818
    %v1820 = vmul.f32 %v1817, 1.442695
    %v1821 = vpow.pop %v1820
    %v1822 = vsub.f32 %v1766, %v1784
    %v1823 = vsub.f32 %v1773, %v1785
    %v1824 = vmul.f32 %v1822, 1.442695
    %v1825 = vpow.pop %v1824
    %v1826 = vmul.f32 %v1823, 1.442695
    %v1827 = vpow.pop %v1826
    %v1828 = vadd.f32 %v1789, %v1795
    %v1829 = vadd.f32 %v1791, %v1797
    %v1830 = vadd.f32 %v1828, %v1801
    %v1831 = vadd.f32 %v1829, %v1803
    %v1832 = vadd.f32 %v1830, %v1807
    %v1833 = vadd.f32 %v1831, %v1809
    %v1834 = vadd.f32 %v1832, %v1813
    %v1835 = vadd.f32 %v1833, %v1815
    %v1836 = vadd.f32 %v1834, %v1819
    %v1837 = vadd.f32 %v1835, %v1821
    %v1838 = vadd.f32 %v1836, %v1825
    %v1839 = vadd.f32 %v1837, %v1827
    %v1840 = vrcp.pop %v1838
    %v1841 = vrcp.pop %v1839
    %v1842 = vmul.f32 %v1838, %v1840
    %v1843 = vmul.f32 %v1839, %v1841
    %v1844 = vsub.f32 2.0, %v1842
    %v1845 = vsub.f32 2.0, %v1843
    %v1846 = vmul.f32 %v1840, %v1844
    %v1847 = vmul.f32 %v1841, %v1845
    %v1848 = vmul.f32 %v1838, %v1846
    %v1849 = vmul.f32 %v1839, %v1847
    %v1850 = vsub.f32 2.0, %v1848
    %v1851 = vsub.f32 2.0, %v1849
    %v1852 = vmul.f32 %v1846, %v1850
    %v1853 = vmul.f32 %v1847, %v1851
    %v1854 = vld [vmem:[#allocation2] sm:$0xff]
    %v1855 = vld [vmem:[#allocation2 + $0x8] sm:$0xff]
    %v1856 = vld [vmem:[#allocation2 + $0x10] sm:$0xff]
    %v1857 = vld [vmem:[#allocation2 + $0x18] sm:$0xff]
    %v1858 = vld [vmem:[#allocation2 + $0x20] sm:$0xff]
    %v1859 = vld [vmem:[#allocation2 + $0x28] sm:$0xff]
    %v1860 = vld [vmem:[#allocation2 + $0x30] sm:$0xff]
    %v1861 = vld [vmem:[#allocation2 + $0x38] sm:$0xff]
    %v1862 = vmul.f32 %v1789, %v1854
    %v1863 = vmul.f32 %v1791, %v1855
    %v1864 = vmul.f32 %v1789, %v1856
    %v1865 = vmul.f32 %v1791, %v1857
    %v1866 = vmul.f32 %v1789, %v1858
    %v1867 = vmul.f32 %v1791, %v1859
    %v1868 = vmul.f32 %v1789, %v1860
    %v1869 = vmul.f32 %v1791, %v1861
    %v1870 = vld [vmem:[#allocation2 + $0x80] sm:$0xff]
    %v1871 = vld [vmem:[#allocation2 + $0x88] sm:$0xff]
    %v1872 = vld [vmem:[#allocation2 + $0x90] sm:$0xff]
    %v1873 = vld [vmem:[#allocation2 + $0x98] sm:$0xff]
    %v1874 = vld [vmem:[#allocation2 + $0xa0] sm:$0xff]
    %v1875 = vld [vmem:[#allocation2 + $0xa8] sm:$0xff]
    %v1876 = vld [vmem:[#allocation2 + $0xb0] sm:$0xff]
    %v1877 = vld [vmem:[#allocation2 + $0xb8] sm:$0xff]
    %v1878 = vmul.f32 %v1795, %v1870
    %v1879 = vmul.f32 %v1797, %v1871
    %v1880 = vmul.f32 %v1795, %v1872
    %v1881 = vmul.f32 %v1797, %v1873
    %v1882 = vmul.f32 %v1795, %v1874
    %v1883 = vmul.f32 %v1797, %v1875
    %v1884 = vmul.f32 %v1795, %v1876
    %v1885 = vmul.f32 %v1797, %v1877
    %v1886 = vadd.f32 %v1862, %v1878
    %v1887 = vadd.f32 %v1863, %v1879
    %v1888 = vadd.f32 %v1864, %v1880
    %v1889 = vadd.f32 %v1865, %v1881
    %v1890 = vadd.f32 %v1866, %v1882
    %v1891 = vadd.f32 %v1867, %v1883
    %v1892 = vadd.f32 %v1868, %v1884
    %v1893 = vadd.f32 %v1869, %v1885
    %v1894 = vld [vmem:[#allocation2 + $0x100] sm:$0xff]
    %v1895 = vld [vmem:[#allocation2 + $0x108] sm:$0xff]
    %v1896 = vld [vmem:[#allocation2 + $0x110] sm:$0xff]
    %v1897 = vld [vmem:[#allocation2 + $0x118] sm:$0xff]
    %v1898 = vld [vmem:[#allocation2 + $0x120] sm:$0xff]
    %v1899 = vld [vmem:[#allocation2 + $0x128] sm:$0xff]
    %v1900 = vld [vmem:[#allocation2 + $0x130] sm:$0xff]
    %v1901 = vld [vmem:[#allocation2 + $0x138] sm:$0xff]
    %v1902 = vmul.f32 %v1801, %v1894
    %v1903 = vmul.f32 %v1803, %v1895
    %v1904 = vmul.f32 %v1801, %v1896
    %v1905 = vmul.f32 %v1803, %v1897
    %v1906 = vmul.f32 %v1801, %v1898
    %v1907 = vmul.f32 %v1803, %v1899
    %v1908 = vmul.f32 %v1801, %v1900
    %v1909 = vmul.f32 %v1803, %v1901
    %v1910 = vadd.f32 %v1886, %v1902
    %v1911 = vadd.f32 %v1887, %v1903
    %v1912 = vadd.f32 %v1888, %v1904
    %v1913 = vadd.f32 %v1889, %v1905
    %v1914 = vadd.f32 %v1890, %v1906
    %v1915 = vadd.f32 %v1891, %v1907
    %v1916 = vadd.f32 %v1892, %v1908
    %v1917 = vadd.f32 %v1893, %v1909
    %v1918 = vld [vmem:[#allocation2 + $0x180] sm:$0xff]
    %v1919 = vld [vmem:[#allocation2 + $0x188] sm:$0xff]
    %v1920 = vld [vmem:[#allocation2 + $0x190] sm:$0xff]
    %v1921 = vld [vmem:[#allocation2 + $0x198] sm:$0xff]
    %v1922 = vld [vmem:[#allocation2 + $0x1a0] sm:$0xff]
    %v1923 = vld [vmem:[#allocation2 + $0x1a8] sm:$0xff]
    %v1924 = vld [vmem:[#allocation2 + $0x1b0] sm:$0xff]
    %v1925 = vld [vmem:[#allocation2 + $0x1b8] sm:$0xff]
    %v1926 = vmul.f32 %v1807, %v1918
    %v1927 = vmul.f32 %v1809, %v1919
    %v1928 = vmul.f32 %v1807, %v1920
    %v1929 = vmul.f32 %v1809, %v1921
    %v1930 = vmul.f32 %v1807, %v1922
    %v1931 = vmul.f32 %v1809, %v1923
    %v1932 = vmul.f32 %v1807, %v1924
    %v1933 = vmul.f32 %v1809, %v1925
    %v1934 = vadd.f32 %v1910, %v1926
    %v1935 = vadd.f32 %v1911, %v1927
    %v1936 = vadd.f32 %v1912, %v1928
    %v1937 = vadd.f32 %v1913, %v1929
    %v1938 = vadd.f32 %v1914, %v1930
    %v1939 = vadd.f32 %v1915, %v1931
    %v1940 = vadd.f32 %v1916, %v1932
    %v1941 = vadd.f32 %v1917, %v1933
    %v1942 = vld [vmem:[#allocation2 + $0x200] sm:$0xff]
    %v1943 = vld [vmem:[#allocation2 + $0x208] sm:$0xff]
    %v1944 = vld [vmem:[#allocation2 + $0x210] sm:$0xff]
    %v1945 = vld [vmem:[#allocation2 + $0x218] sm:$0xff]
    %v1946 = vld [vmem:[#allocation2 + $0x220] sm:$0xff]
    %v1947 = vld [vmem:[#allocation2 + $0x228] sm:$0xff]
    %v1948 = vld [vmem:[#allocation2 + $0x230] sm:$0xff]
    %v1949 = vld [vmem:[#allocation2 + $0x238] sm:$0xff]
    %v1950 = vmul.f32 %v1813, %v1942
    %v1951 = vmul.f32 %v1815, %v1943
    %v1952 = vmul.f32 %v1813, %v1944
    %v1953 = vmul.f32 %v1815, %v1945
    %v1954 = vmul.f32 %v1813, %v1946
    %v1955 = vmul.f32 %v1815, %v1947
    %v1956 = vmul.f32 %v1813, %v1948
    %v1957 = vmul.f32 %v1815, %v1949
    %v1958 = vadd.f32 %v1934, %v1950
    %v1959 = vadd.f32 %v1935, %v1951
    %v1960 = vadd.f32 %v1936, %v1952
    %v1961 = vadd.f32 %v1937, %v1953
    %v1962 = vadd.f32 %v1938, %v1954
    %v1963 = vadd.f32 %v1939, %v1955
    %v1964 = vadd.f32 %v1940, %v1956
    %v1965 = vadd.f32 %v1941, %v1957
    %v1966 = vld [vmem:[#allocation2 + $0x280] sm:$0xff]
    %v1967 = vld [vmem:[#allocation2 + $0x288] sm:$0xff]
    %v1968 = vld [vmem:[#allocation2 + $0x290] sm:$0xff]
    %v1969 = vld [vmem:[#allocation2 + $0x298] sm:$0xff]
    %v1970 = vld [vmem:[#allocation2 + $0x2a0] sm:$0xff]
    %v1971 = vld [vmem:[#allocation2 + $0x2a8] sm:$0xff]
    %v1972 = vld [vmem:[#allocation2 + $0x2b0] sm:$0xff]
    %v1973 = vld [vmem:[#allocation2 + $0x2b8] sm:$0xff]
    %v1974 = vmul.f32 %v1819, %v1966
    %v1975 = vmul.f32 %v1821, %v1967
    %v1976 = vmul.f32 %v1819, %v1968
    %v1977 = vmul.f32 %v1821, %v1969
    %v1978 = vmul.f32 %v1819, %v1970
    %v1979 = vmul.f32 %v1821, %v1971
    %v1980 = vmul.f32 %v1819, %v1972
    %v1981 = vmul.f32 %v1821, %v1973
    %v1982 = vadd.f32 %v1958, %v1974
    %v1983 = vadd.f32 %v1959, %v1975
    %v1984 = vadd.f32 %v1960, %v1976
    %v1985 = vadd.f32 %v1961, %v1977
    %v1986 = vadd.f32 %v1962, %v1978
    %v1987 = vadd.f32 %v1963, %v1979
    %v1988 = vadd.f32 %v1964, %v1980
    %v1989 = vadd.f32 %v1965, %v1981
    %v1990 = vld [vmem:[#allocation2 + $0x300] sm:$0xff]
    %v1991 = vld [vmem:[#allocation2 + $0x308] sm:$0xff]
    %v1992 = vld [vmem:[#allocation2 + $0x310] sm:$0xff]
    %v1993 = vld [vmem:[#allocation2 + $0x318] sm:$0xff]
    %v1994 = vld [vmem:[#allocation2 + $0x320] sm:$0xff]
    %v1995 = vld [vmem:[#allocation2 + $0x328] sm:$0xff]
    %v1996 = vld [vmem:[#allocation2 + $0x330] sm:$0xff]
    %v1997 = vld [vmem:[#allocation2 + $0x338] sm:$0xff]
    %v1998 = vmul.f32 %v1825, %v1990
    %v1999 = vmul.f32 %v1827, %v1991
    %v2000 = vmul.f32 %v1825, %v1992
    %v2001 = vmul.f32 %v1827, %v1993
    %v2002 = vmul.f32 %v1825, %v1994
    %v2003 = vmul.f32 %v1827, %v1995
    %v2004 = vmul.f32 %v1825, %v1996
    %v2005 = vmul.f32 %v1827, %v1997
    %v2006 = vadd.f32 %v1982, %v1998
    %v2007 = vadd.f32 %v1983, %v1999
    %v2008 = vadd.f32 %v1984, %v2000
    %v2009 = vadd.f32 %v1985, %v2001
    %v2010 = vadd.f32 %v1986, %v2002
    %v2011 = vadd.f32 %v1987, %v2003
    %v2012 = vadd.f32 %v1988, %v2004
    %v2013 = vadd.f32 %v1989, %v2005
    %v2014 = vmul.f32 %v2006, %v1852
    %v2015 = vmul.f32 %v2007, %v1853
    %v2016 = vmul.f32 %v2008, %v1852
    %v2017 = vmul.f32 %v2009, %v1853
    %v2018 = vmul.f32 %v2010, %v1852
    %v2019 = vmul.f32 %v2011, %v1853
    %v2020 = vmul.f32 %v2012, %v1852
    %v2021 = vmul.f32 %v2013, %v1853
    %2022 = vst [vmem:[#allocation3 + $0x40] sm:$0xff] %v2014
    %2023 = vst [vmem:[#allocation3 + $0x48] sm:$0xff] %v2015
    %2024 = vst [vmem:[#allocation3 + $0x50] sm:$0xff] %v2016
    %2025 = vst [vmem:[#allocation3 + $0x58] sm:$0xff] %v2017
    %2026 = vst [vmem:[#allocation3 + $0x60] sm:$0xff] %v2018
    %2027 = vst [vmem:[#allocation3 + $0x68] sm:$0xff] %v2019
    %2028 = vst [vmem:[#allocation3 + $0x70] sm:$0xff] %v2020
    %2029 = vst [vmem:[#allocation3 + $0x78] sm:$0xff] %v2021
    %v2030 = vld [vmem:[#allocation2 + $0x160] sm:$0xff]
    %v2031 = vld [vmem:[#allocation2 + $0x168] sm:$0xff]
    %v2032 = vld [vmem:[#allocation2 + $0x170] sm:$0xff]
    %v2033 = vld [vmem:[#allocation2 + $0x178] sm:$0xff]
    %v2034 = vld [vmem:[#allocation2 + $0x40] sm:$0xff]
    %v2035 = vld [vmem:[#allocation2 + $0x48] sm:$0xff]
    %v2036 = vld [vmem:[#allocation2 + $0x50] sm:$0xff]
    %v2037 = vld [vmem:[#allocation2 + $0x58] sm:$0xff]
    %v2038 = vmul.f32 %v2034, %v2030
    %v2039 = vmul.f32 %v2035, %v2031
    %v2040 = vmul.f32 %v2036, %v2032
    %v2041 = vmul.f32 %v2037, %v2033
    %v2042 = vadd.f32 %v2038, %v2040
    %v2043 = vrot.slane %v2042, 4
    %v2044 = vadd.f32 %v2042, %v2043
    %v2045 = vrot.slane %v2044, 2
    %v2046 = vadd.f32 %v2044, %v2045
    %v2047 = vrot.slane %v2046, 1
    %v2048 = vadd.f32 %v2046, %v2047
    %v2049 = vadd.f32 %v2039, %v2041
    %v2050 = vrot.slane %v2049, 4
    %v2051 = vadd.f32 %v2049, %v2050
    %v2052 = vrot.slane %v2051, 2
    %v2053 = vadd.f32 %v2051, %v2052
    %v2054 = vrot.slane %v2053, 1
    %v2055 = vadd.f32 %v2053, %v2054
    %v2056 = vld [vmem:[#allocation2 + $0xc0] sm:$0xff]
    %v2057 = vld [vmem:[#allocation2 + $0xc8] sm:$0xff]
    %v2058 = vld [vmem:[#allocation2 + $0xd0] sm:$0xff]
    %v2059 = vld [vmem:[#allocation2 + $0xd8] sm:$0xff]
    %v2060 = vmul.f32 %v2056, %v2030
    %v2061 = vmul.f32 %v2057, %v2031
    %v2062 = vmul.f32 %v2058, %v2032
    %v2063 = vmul.f32 %v2059, %v2033
    %v2064 = vadd.f32 %v2060, %v2062
    %v2065 = vrot.slane %v2064, 4
    %v2066 = vadd.f32 %v2064, %v2065
    %v2067 = vrot.slane %v2066, 2
    %v2068 = vadd.f32 %v2066, %v2067
    %v2069 = vrot.slane %v2068, 1
    %v2070 = vadd.f32 %v2068, %v2069
    %v2071 = vadd.f32 %v2061, %v2063
    %v2072 = vrot.slane %v2071, 4
    %v2073 = vadd.f32 %v2071, %v2072
    %v2074 = vrot.slane %v2073, 2
    %v2075 = vadd.f32 %v2073, %v2074
    %v2076 = vrot.slane %v2075, 1
    %v2077 = vadd.f32 %v2075, %v2076
    %v2078 = vld [vmem:[#allocation2 + $0x140] sm:$0xff]
    %v2079 = vld [vmem:[#allocation2 + $0x148] sm:$0xff]
    %v2080 = vld [vmem:[#allocation2 + $0x150] sm:$0xff]
    %v2081 = vld [vmem:[#allocation2 + $0x158] sm:$0xff]
    %v2082 = vmul.f32 %v2078, %v2030
    %v2083 = vmul.f32 %v2079, %v2031
    %v2084 = vmul.f32 %v2080, %v2032
    %v2085 = vmul.f32 %v2081, %v2033
    %v2086 = vadd.f32 %v2082, %v2084
    %v2087 = vrot.slane %v2086, 4
    %v2088 = vadd.f32 %v2086, %v2087
    %v2089 = vrot.slane %v2088, 2
    %v2090 = vadd.f32 %v2088, %v2089
    %v2091 = vrot.slane %v2090, 1
    %v2092 = vadd.f32 %v2090, %v2091
    %v2093 = vadd.f32 %v2083, %v2085
    %v2094 = vrot.slane %v2093, 4
    %v2095 = vadd.f32 %v2093, %v2094
    %v2096 = vrot.slane %v2095, 2
    %v2097 = vadd.f32 %v2095, %v2096
    %v2098 = vrot.slane %v2097, 1
    %v2099 = vadd.f32 %v2097, %v2098
    %v2100 = vld [vmem:[#allocation2 + $0x1c0] sm:$0xff]
    %v2101 = vld [vmem:[#allocation2 + $0x1c8] sm:$0xff]
    %v2102 = vld [vmem:[#allocation2 + $0x1d0] sm:$0xff]
    %v2103 = vld [vmem:[#allocation2 + $0x1d8] sm:$0xff]
    %v2104 = vmul.f32 %v2100, %v2030
    %v2105 = vmul.f32 %v2101, %v2031
    %v2106 = vmul.f32 %v2102, %v2032
    %v2107 = vmul.f32 %v2103, %v2033
    %v2108 = vadd.f32 %v2104, %v2106
    %v2109 = vrot.slane %v2108, 4
    %v2110 = vadd.f32 %v2108, %v2109
    %v2111 = vrot.slane %v2110, 2
    %v2112 = vadd.f32 %v2110, %v2111
    %v2113 = vrot.slane %v2112, 1
    %v2114 = vadd.f32 %v2112, %v2113
    %v2115 = vadd.f32 %v2105, %v2107
    %v2116 = vrot.slane %v2115, 4
    %v2117 = vadd.f32 %v2115, %v2116
    %v2118 = vrot.slane %v2117, 2
    %v2119 = vadd.f32 %v2117, %v2118
    %v2120 = vrot.slane %v2119, 1
    %v2121 = vadd.f32 %v2119, %v2120
    %v2122 = vld [vmem:[#allocation2 + $0x240] sm:$0xff]
    %v2123 = vld [vmem:[#allocation2 + $0x248] sm:$0xff]
    %v2124 = vld [vmem:[#allocation2 + $0x250] sm:$0xff]
    %v2125 = vld [vmem:[#allocation2 + $0x258] sm:$0xff]
    %v2126 = vmul.f32 %v2122, %v2030
    %v2127 = vmul.f32 %v2123, %v2031
    %v2128 = vmul.f32 %v2124, %v2032
    %v2129 = vmul.f32 %v2125, %v2033
    %v2130 = vadd.f32 %v2126, %v2128
    %v2131 = vrot.slane %v2130, 4
    %v2132 = vadd.f32 %v2130, %v2131
    %v2133 = vrot.slane %v2132, 2
    %v2134 = vadd.f32 %v2132, %v2133
    %v2135 = vrot.slane %v2134, 1
    %v2136 = vadd.f32 %v2134, %v2135
    %v2137 = vadd.f32 %v2127, %v2129
    %v2138 = vrot.slane %v2137, 4
    %v2139 = vadd.f32 %v2137, %v2138
    %v2140 = vrot.slane %v2139, 2
    %v2141 = vadd.f32 %v2139, %v2140
    %v2142 = vrot.slane %v2141, 1
    %v2143 = vadd.f32 %v2141, %v2142
    %v2144 = vld [vmem:[#allocation2 + $0x2c0] sm:$0xff]
    %v2145 = vld [vmem:[#allocation2 + $0x2c8] sm:$0xff]
    %v2146 = vld [vmem:[#allocation2 + $0x2d0] sm:$0xff]
    %v2147 = vld [vmem:[#allocation2 + $0x2d8] sm:$0xff]
    %v2148 = vmul.f32 %v2144, %v2030
    %v2149 = vmul.f32 %v2145, %v2031
    %v2150 = vmul.f32 %v2146, %v2032
    %v2151 = vmul.f32 %v2147, %v2033
    %v2152 = vadd.f32 %v2148, %v2150
    %v2153 = vrot.slane %v2152, 4
    %v2154 = vadd.f32 %v2152, %v2153
    %v2155 = vrot.slane %v2154, 2
    %v2156 = vadd.f32 %v2154, %v2155
    %v2157 = vrot.slane %v2156, 1
    %v2158 = vadd.f32 %v2156, %v2157
    %v2159 = vadd.f32 %v2149, %v2151
    %v2160 = vrot.slane %v2159, 4
    %v2161 = vadd.f32 %v2159, %v2160
    %v2162 = vrot.slane %v2161, 2
    %v2163 = vadd.f32 %v2161, %v2162
    %v2164 = vrot.slane %v2163, 1
    %v2165 = vadd.f32 %v2163, %v2164
    %v2166 = vld [vmem:[#allocation2 + $0x340] sm:$0xff]
    %v2167 = vld [vmem:[#allocation2 + $0x348] sm:$0xff]
    %v2168 = vld [vmem:[#allocation2 + $0x350] sm:$0xff]
    %v2169 = vld [vmem:[#allocation2 + $0x358] sm:$0xff]
    %v2170 = vmul.f32 %v2166, %v2030
    %v2171 = vmul.f32 %v2167, %v2031
    %v2172 = vmul.f32 %v2168, %v2032
    %v2173 = vmul.f32 %v2169, %v2033
    %v2174 = vadd.f32 %v2170, %v2172
    %v2175 = vrot.slane %v2174, 4
    %v2176 = vadd.f32 %v2174, %v2175
    %v2177 = vrot.slane %v2176, 2
    %v2178 = vadd.f32 %v2176, %v2177
    %v2179 = vrot.slane %v2178, 1
    %v2180 = vadd.f32 %v2178, %v2179
    %v2181 = vadd.f32 %v2171, %v2173
    %v2182 = vrot.slane %v2181, 4
    %v2183 = vadd.f32 %v2181, %v2182
    %v2184 = vrot.slane %v2183, 2
    %v2185 = vadd.f32 %v2183, %v2184
    %v2186 = vrot.slane %v2185, 1
    %v2187 = vadd.f32 %v2185, %v2186
    %v2188 = vmax.f32 %v2048, %v2070
    %v2189 = vmax.f32 %v2055, %v2077
    %v2190 = vmax.f32 %v2188, %v2092
    %v2191 = vmax.f32 %v2189, %v2099
    %v2192 = vmax.f32 %v2190, %v2114
    %v2193 = vmax.f32 %v2191, %v2121
    %v2194 = vmax.f32 %v2192, %v2136
    %v2195 = vmax.f32 %v2193, %v2143
    %v2196 = vmax.f32 %v2194, %v2158
    %v2197 = vmax.f32 %v2195, %v2165
    %v2198 = vmax.f32 %v2196, %v2180
    %v2199 = vmax.f32 %v2197, %v2187
    %v2200 = vsub.f32 %v2048, %v2198
    %v2201 = vsub.f32 %v2055, %v2199
    %v2202 = vmul.f32 %v2200, 1.442695
    %v2203 = vpow.pop %v2202
    %v2204 = vmul.f32 %v2201, 1.442695
    %v2205 = vpow.pop %v2204
    %v2206 = vsub.f32 %v2070, %v2198
    %v2207 = vsub.f32 %v2077, %v2199
    %v2208 = vmul.f32 %v2206, 1.442695
    %v2209 = vpow.pop %v2208
    %v2210 = vmul.f32 %v2207, 1.442695
    %v2211 = vpow.pop %v2210
    %v2212 = vsub.f32 %v2092, %v2198
    %v2213 = vsub.f32 %v2099, %v2199
    %v2214 = vmul.f32 %v2212, 1.442695
    %v2215 = vpow.pop %v2214
    %v2216 = vmul.f32 %v2213, 1.442695
    %v2217 = vpow.pop %v2216
    %v2218 = vsub.f32 %v2114, %v2198
    %v2219 = vsub.f32 %v2121, %v2199
    %v2220 = vmul.f32 %v2218, 1.442695
    %v2221 = vpow.pop %v2220
    %v2222 = vmul.f32 %v2219, 1.442695
    %v2223 = vpow.pop %v2222
    %v2224 = vsub.f32 %v2136, %v2198
    %v2225 = vsub.f32 %v2143, %v2199
    %v2226 = vmul.f32 %v2224, 1.442695
    %v2227 = vpow.pop %v2226
    %v2228 = vmul.f32 %v2225, 1.442695
    %v2229 = vpow.pop %v2228
    %v2230 = vsub.f32 %v2158, %v2198
    %v2231 = vsub.f32 %v2165, %v2199
    %v2232 = vmul.f32 %v2230, 1.442695
    %v2233 = vpow.pop %v2232
    %v2234 = vmul.f32 %v2231, 1.442695
    %v2235 = vpow.pop %v2234
    %v2236 = vsub.f32 %v2180, %v2198
    %v2237 = vsub.f32 %v2187, %v2199
    %v2238 = vmul.f32 %v2236, 1.442695
    %v2239 = vpow.pop %v2238
    %v2240 = vmul.f32 %v2237, 1.442695
    %v2241 = vpow.pop %v2240
    %v2242 = vadd.f32 %v2203, %v2209
    %v2243 = vadd.f32 %v2205, %v2211
    %v2244 = vadd.f32 %v2242, %v2215
    %v2245 = vadd.f32 %v2243, %v2217
    %v2246 = vadd.f32 %v2244, %v2221
    %v2247 = vadd.f32 %v2245, %v2223
    %v2248 = vadd.f32 %v2246, %v2227
    %v2249 = vadd.f32 %v2247, %v2229
    %v2250 = vadd.f32 %v2248, %v2233
    %v2251 = vadd.f32 %v2249, %v2235
    %v2252 = vadd.f32 %v2250, %v2239
    %v2253 = vadd.f32 %v2251, %v2241
    %v2254 = vrcp.pop %v2252
    %v2255 = vrcp.pop %v2253
    %v2256 = vmul.f32 %v2252, %v2254
    %v2257 = vmul.f32 %v2253, %v2255
    %v2258 = vsub.f32 2.0, %v2256
    %v2259 = vsub.f32 2.0, %v2257
    %v2260 = vmul.f32 %v2254, %v2258
    %v2261 = vmul.f32 %v2255, %v2259
    %v2262 = vmul.f32 %v2252, %v2260
    %v2263 = vmul.f32 %v2253, %v2261
    %v2264 = vsub.f32 2.0, %v2262
    %v2265 = vsub.f32 2.0, %v2263
    %v2266 = vmul.f32 %v2260, %v2264
    %v2267 = vmul.f32 %v2261, %v2265
    %v2268 = vld [vmem:[#allocation2] sm:$0xff]
    %v2269 = vld [vmem:[#allocation2 + $0x8] sm:$0xff]
    %v2270 = vld [vmem:[#allocation2 + $0x10] sm:$0xff]
    %v2271 = vld [vmem:[#allocation2 + $0x18] sm:$0xff]
    %v2272 = vld [vmem:[#allocation2 + $0x20] sm:$0xff]
    %v2273 = vld [vmem:[#allocation2 + $0x28] sm:$0xff]
    %v2274 = vld [vmem:[#allocation2 + $0x30] sm:$0xff]
    %v2275 = vld [vmem:[#allocation2 + $0x38] sm:$0xff]
    %v2276 = vmul.f32 %v2203, %v2268
    %v2277 = vmul.f32 %v2205, %v2269
    %v2278 = vmul.f32 %v2203, %v2270
    %v2279 = vmul.f32 %v2205, %v2271
    %v2280 = vmul.f32 %v2203, %v2272
    %v2281 = vmul.f32 %v2205, %v2273
    %v2282 = vmul.f32 %v2203, %v2274
    %v2283 = vmul.f32 %v2205, %v2275
    %v2284 = vld [vmem:[#allocation2 + $0x80] sm:$0xff]
    %v2285 = vld [vmem:[#allocation2 + $0x88] sm:$0xff]
    %v2286 = vld [vmem:[#allocation2 + $0x90] sm:$0xff]
    %v2287 = vld [vmem:[#allocation2 + $0x98] sm:$0xff]
    %v2288 = vld [vmem:[#allocation2 + $0xa0] sm:$0xff]
    %v2289 = vld [vmem:[#allocation2 + $0xa8] sm:$0xff]
    %v2290 = vld [vmem:[#allocation2 + $0xb0] sm:$0xff]
    %v2291 = vld [vmem:[#allocation2 + $0xb8] sm:$0xff]
    %v2292 = vmul.f32 %v2209, %v2284
    %v2293 = vmul.f32 %v2211, %v2285
    %v2294 = vmul.f32 %v2209, %v2286
    %v2295 = vmul.f32 %v2211, %v2287
    %v2296 = vmul.f32 %v2209, %v2288
    %v2297 = vmul.f32 %v2211, %v2289
    %v2298 = vmul.f32 %v2209, %v2290
    %v2299 = vmul.f32 %v2211, %v2291
    %v2300 = vadd.f32 %v2276, %v2292
    %v2301 = vadd.f32 %v2277, %v2293
    %v2302 = vadd.f32 %v2278, %v2294
    %v2303 = vadd.f32 %v2279, %v2295
    %v2304 = vadd.f32 %v2280, %v2296
    %v2305 = vadd.f32 %v2281, %v2297
    %v2306 = vadd.f32 %v2282, %v2298
    %v2307 = vadd.f32 %v2283, %v2299
    %v2308 = vld [vmem:[#allocation2 + $0x100] sm:$0xff]
    %v2309 = vld [vmem:[#allocation2 + $0x108] sm:$0xff]
    %v2310 = vld [vmem:[#allocation2 + $0x110] sm:$0xff]
    %v2311 = vld [vmem:[#allocation2 + $0x118] sm:$0xff]
    %v2312 = vld [vmem:[#allocation2 + $0x120] sm:$0xff]
    %v2313 = vld [vmem:[#allocation2 + $0x128] sm:$0xff]
    %v2314 = vld [vmem:[#allocation2 + $0x130] sm:$0xff]
    %v2315 = vld [vmem:[#allocation2 + $0x138] sm:$0xff]
    %v2316 = vmul.f32 %v2215, %v2308
    %v2317 = vmul.f32 %v2217, %v2309
    %v2318 = vmul.f32 %v2215, %v2310
    %v2319 = vmul.f32 %v2217, %v2311
    %v2320 = vmul.f32 %v2215, %v2312
    %v2321 = vmul.f32 %v2217, %v2313
    %v2322 = vmul.f32 %v2215, %v2314
    %v2323 = vmul.f32 %v2217, %v2315
    %v2324 = vadd.f32 %v2300, %v2316
    %v2325 = vadd.f32 %v2301, %v2317
    %v2326 = vadd.f32 %v2302, %v2318
    %v2327 = vadd.f32 %v2303, %v2319
    %v2328 = vadd.f32 %v2304, %v2320
    %v2329 = vadd.f32 %v2305, %v2321
    %v2330 = vadd.f32 %v2306, %v2322
    %v2331 = vadd.f32 %v2307, %v2323
    %v2332 = vld [vmem:[#allocation2 + $0x180] sm:$0xff]
    %v2333 = vld [vmem:[#allocation2 + $0x188] sm:$0xff]
    %v2334 = vld [vmem:[#allocation2 + $0x190] sm:$0xff]
    %v2335 = vld [vmem:[#allocation2 + $0x198] sm:$0xff]
    %v2336 = vld [vmem:[#allocation2 + $0x1a0] sm:$0xff]
    %v2337 = vld [vmem:[#allocation2 + $0x1a8] sm:$0xff]
    %v2338 = vld [vmem:[#allocation2 + $0x1b0] sm:$0xff]
    %v2339 = vld [vmem:[#allocation2 + $0x1b8] sm:$0xff]
    %v2340 = vmul.f32 %v2221, %v2332
    %v2341 = vmul.f32 %v2223, %v2333
    %v2342 = vmul.f32 %v2221, %v2334
    %v2343 = vmul.f32 %v2223, %v2335
    %v2344 = vmul.f32 %v2221, %v2336
    %v2345 = vmul.f32 %v2223, %v2337
    %v2346 = vmul.f32 %v2221, %v2338
    %v2347 = vmul.f32 %v2223, %v2339
    %v2348 = vadd.f32 %v2324, %v2340
    %v2349 = vadd.f32 %v2325, %v2341
    %v2350 = vadd.f32 %v2326, %v2342
    %v2351 = vadd.f32 %v2327, %v2343
    %v2352 = vadd.f32 %v2328, %v2344
    %v2353 = vadd.f32 %v2329, %v2345
    %v2354 = vadd.f32 %v2330, %v2346
    %v2355 = vadd.f32 %v2331, %v2347
    %v2356 = vld [vmem:[#allocation2 + $0x200] sm:$0xff]
    %v2357 = vld [vmem:[#allocation2 + $0x208] sm:$0xff]
    %v2358 = vld [vmem:[#allocation2 + $0x210] sm:$0xff]
    %v2359 = vld [vmem:[#allocation2 + $0x218] sm:$0xff]
    %v2360 = vld [vmem:[#allocation2 + $0x220] sm:$0xff]
    %v2361 = vld [vmem:[#allocation2 + $0x228] sm:$0xff]
    %v2362 = vld [vmem:[#allocation2 + $0x230] sm:$0xff]
    %v2363 = vld [vmem:[#allocation2 + $0x238] sm:$0xff]
    %v2364 = vmul.f32 %v2227, %v2356
    %v2365 = vmul.f32 %v2229, %v2357
    %v2366 = vmul.f32 %v2227, %v2358
    %v2367 = vmul.f32 %v2229, %v2359
    %v2368 = vmul.f32 %v2227, %v2360
    %v2369 = vmul.f32 %v2229, %v2361
    %v2370 = vmul.f32 %v2227, %v2362
    %v2371 = vmul.f32 %v2229, %v2363
    %v2372 = vadd.f32 %v2348, %v2364
    %v2373 = vadd.f32 %v2349, %v2365
    %v2374 = vadd.f32 %v2350, %v2366
    %v2375 = vadd.f32 %v2351, %v2367
    %v2376 = vadd.f32 %v2352, %v2368
    %v2377 = vadd.f32 %v2353, %v2369
    %v2378 = vadd.f32 %v2354, %v2370
    %v2379 = vadd.f32 %v2355, %v2371
    %v2380 = vld [vmem:[#allocation2 + $0x280] sm:$0xff]
    %v2381 = vld [vmem:[#allocation2 + $0x288] sm:$0xff]
    %v2382 = vld [vmem:[#allocation2 + $0x290] sm:$0xff]
    %v2383 = vld [vmem:[#allocation2 + $0x298] sm:$0xff]
    %v2384 = vld [vmem:[#allocation2 + $0x2a0] sm:$0xff]
    %v2385 = vld [vmem:[#allocation2 + $0x2a8] sm:$0xff]
    %v2386 = vld [vmem:[#allocation2 + $0x2b0] sm:$0xff]
    %v2387 = vld [vmem:[#allocation2 + $0x2b8] sm:$0xff]
    %v2388 = vmul.f32 %v2233, %v2380
    %v2389 = vmul.f32 %v2235, %v2381
    %v2390 = vmul.f32 %v2233, %v2382
    %v2391 = vmul.f32 %v2235, %v2383
    %v2392 = vmul.f32 %v2233, %v2384
    %v2393 = vmul.f32 %v2235, %v2385
    %v2394 = vmul.f32 %v2233, %v2386
    %v2395 = vmul.f32 %v2235, %v2387
    %v2396 = vadd.f32 %v2372, %v2388
    %v2397 = vadd.f32 %v2373, %v2389
    %v2398 = vadd.f32 %v2374, %v2390
    %v2399 = vadd.f32 %v2375, %v2391
    %v2400 = vadd.f32 %v2376, %v2392
    %v2401 = vadd.f32 %v2377, %v2393
    %v2402 = vadd.f32 %v2378, %v2394
    %v2403 = vadd.f32 %v2379, %v2395
    %v2404 = vld [vmem:[#allocation2 + $0x300] sm:$0xff]
    %v2405 = vld [vmem:[#allocation2 + $0x308] sm:$0xff]
    %v2406 = vld [vmem:[#allocation2 + $0x310] sm:$0xff]
    %v2407 = vld [vmem:[#allocation2 + $0x318] sm:$0xff]
    %v2408 = vld [vmem:[#allocation2 + $0x320] sm:$0xff]
    %v2409 = vld [vmem:[#allocation2 + $0x328] sm:$0xff]
    %v2410 = vld [vmem:[#allocation2 + $0x330] sm:$0xff]
    %v2411 = vld [vmem:[#allocation2 + $0x338] sm:$0xff]
    %v2412 = vmul.f32 %v2239, %v2404
    %v2413 = vmul.f32 %v2241, %v2405
    %v2414 = vmul.f32 %v2239, %v2406
    %v2415 = vmul.f32 %v2241, %v2407
    %v2416 = vmul.f32 %v2239, %v2408
    %v2417 = vmul.f32 %v2241, %v2409
    %v2418 = vmul.f32 %v2239, %v2410
    %v2419 = vmul.f32 %v2241, %v2411
    %v2420 = vadd.f32 %v2396, %v2412
    %v2421 = vadd.f32 %v2397, %v2413
    %v2422 = vadd.f32 %v2398, %v2414
    %v2423 = vadd.f32 %v2399, %v2415
    %v2424 = vadd.f32 %v2400, %v2416
    %v2425 = vadd.f32 %v2401, %v2417
    %v2426 = vadd.f32 %v2402, %v2418
    %v2427 = vadd.f32 %v2403, %v2419
    %v2428 = vmul.f32 %v2420, %v2266
    %v2429 = vmul.f32 %v2421, %v2267
    %v2430 = vmul.f32 %v2422, %v2266
    %v2431 = vmul.f32 %v2423, %v2267
    %v2432 = vmul.f32 %v2424, %v2266
    %v2433 = vmul.f32 %v2425, %v2267
    %v2434 = vmul.f32 %v2426, %v2266
    %v2435 = vmul.f32 %v2427, %v2267
    %2436 = vst [vmem:[#allocation3 + $0x80] sm:$0xff] %v2428
    %2437 = vst [vmem:[#allocation3 + $0x88] sm:$0xff] %v2429
    %2438 = vst [vmem:[#allocation3 + $0x90] sm:$0xff] %v2430
    %2439 = vst [vmem:[#allocation3 + $0x98] sm:$0xff] %v2431
    %2440 = vst [vmem:[#allocation3 + $0xa0] sm:$0xff] %v2432
    %2441 = vst [vmem:[#allocation3 + $0xa8] sm:$0xff] %v2433
    %2442 = vst [vmem:[#allocation3 + $0xb0] sm:$0xff] %v2434
    %2443 = vst [vmem:[#allocation3 + $0xb8] sm:$0xff] %v2435
    // Predicated region
    $region10: #{tpu_custom_call.1} parent=1 // pred_check
      _
    $region11: #{tpu_custom_call.1} parent=1 // pred_check_branch
      %2445 = sbr.rel (0) target = $region13
    $region12: #{tpu_custom_call.1} parent=1 // pred_region
      %2447 = vsyncadd [#allocation4], 0
      %s2448 = sshll.u32 [#allocation3], 4
      %s2449 = int_to_ptr.vmem [resolvable:$true] %s2448
      %s2450 = sshll.u32 %s2, 4
      %s2451 = int_to_ptr.hbm [resolvable:$true] %s2450
      %2456 = dma.vmem_to_hbm [thread:$0]  %s2449, 3072, %s2451, [#allocation4], 256, 256, 16
    $region13: #{tpu_custom_call.1} parent=1 // pred_fallthru
      _
    // Predicated region
    $region14: #{tpu_custom_call.1} parent=1 // pred_check
      _
    $region15: #{tpu_custom_call.1} parent=1 // pred_check_branch
      %2458 = sbr.rel (0) target = $region17
    $region16: #{tpu_custom_call.1} parent=1 // pred_region
      %2460 = dma.done [#allocation4], 3072
    $region17: #{tpu_custom_call.1} parent=1 // pred_fallthru
      _
    %2461 = vsyncpa [#allocation4], 1

</llo_original>
